<compile_context>
chip_gen: v5e
topology: v5e:2x2
jax: 0.10.0
libtpu: 0.0.40
codegen_flags: <defaults>
</compile_context>

<pallas_src>
import functools

import jax
import jax.numpy as jnp
from jax.experimental import pallas as pl
from jax.experimental.pallas import tpu as pltpu

BN_EPS = 1e-5
ONES_ROW_BIAS = 30.0  # sigmoid(30.0) rounds to exactly 1.0 in f32


def _baseline_kernel(x_ref, wa_ref, ba_ref, scale_ref, shift_ref, out_ref):
    # x_ref:     (bt, HW, C)   lane-dense feature block (C minor dim)
    # wa_ref:    (C, P+1)      1x1 conv weight, extended with a zero column
    # ba_ref:    (1, P+1)      conv bias, extended with ONES_ROW_BIAS
    # scale_ref: (P+1, C)      folded BN scale (includes 1/HW pool factor)
    # shift_ref: (P+1, C)      folded BN shift
    # out_ref:   (bt, P+1, C)
    bt, hw, c = x_ref.shape
    p1 = wa_ref.shape[1]

    x = x_ref[...]                                     # (bt, HW, C), native dtype
    x2 = x.reshape(bt * hw, c)                         # merge leading dims (free)

    # Attention logits for the whole block in one MXU matmul: (bt*HW, P+1).
    logits = jnp.dot(x2, wa_ref[...], preferred_element_type=jnp.float32)
    masks = jax.nn.sigmoid(logits + ba_ref[...])       # last column == 1.0 (global row)
    masks = masks.reshape(bt, hw, p1).astype(x.dtype)  # (bt, HW, P+1)

    # Masked pools + global pool: batched (P+1, HW) x (HW, C) contraction.
    feats = jax.lax.dot_general(
        masks, x,
        dimension_numbers=(((1,), (1,)), ((0,), (0,))),
        preferred_element_type=jnp.float32)            # (bt, P+1, C)

    # Folded eval-mode BatchNorm1d (scale already contains 1/HW).
    out_ref[...] = (feats * scale_ref[...][None]
                    + shift_ref[...][None]).astype(out_ref.dtype)


def _pick_block_b(B, max_bt=16):
    """Largest divisor of B <= max_bt; keep >= 2 grid steps when B >= 2."""
    best = 1
    for bt in range(1, min(B, max_bt) + 1):
        if B % bt != 0:
            continue
        if B >= 2 and B // bt < 2:
            continue
        best = bt
    return max(best, 1)


@functools.partial(jax.jit, static_argnames=("block_b",))
def baseline_forward(x_nchw, wa_pc, ba, gamma, beta, mean, var, *, block_b=None):
    """x_nchw: (B, C, H, W) backbone feature map. wa_pc: (P, C). Returns (B, (P+1)*C)."""
    B, C, H, W = x_nchw.shape
    HW = H * W
    P = wa_pc.shape[0]

    # Lane-dense layout: (B, HW, C) so the minor dim is a multiple of 128.
    x = jnp.transpose(x_nchw.reshape(B, C, HW), (0, 2, 1))

    # Extend the 1x1-conv weight with a zero column and a saturating bias so the
    # same matmul+sigmoid produces the (exact) unweighted global-pool row.
    wa_ext = jnp.concatenate(
        [wa_pc.T, jnp.zeros((C, 1), wa_pc.dtype)], axis=1).astype(x.dtype)   # (C, P+1)
    ba_ext = jnp.concatenate(
        [ba.astype(jnp.float32),
         jnp.full((1,), ONES_ROW_BIAS, jnp.float32)]).reshape(1, P + 1)      # (1, P+1)

    # Fold eval-mode BN and the 1/HW pool normalisation into scale/shift.
    inv_std = jax.lax.rsqrt(var.astype(jnp.float32) + BN_EPS)
    g = gamma.astype(jnp.float32) * inv_std
    scale = (g / HW).reshape(P + 1, C)
    shift = (beta.astype(jnp.float32)
             - mean.astype(jnp.float32) * g).reshape(P + 1, C)

    bt = _pick_block_b(B) if block_b is None else block_b
    assert B % bt == 0, (B, bt)
    grid = (B // bt,)

    elt = x.dtype.itemsize
    cost = pl.CostEstimate(
        flops=int(4 * B * HW * C * (P + 1)),
        transcendentals=int(B * HW * (P + 1)),
        bytes_accessed=int(B * HW * C * elt + B * (P + 1) * C * 4
                           + (C * (P + 1) + (P + 1) + 2 * (P + 1) * C) * 4),
    )

    out = pl.pallas_call(
        _baseline_kernel,
        out_shape=jax.ShapeDtypeStruct((B, P + 1, C), jnp.float32),
        grid_spec=pltpu.PrefetchScalarGridSpec(
            num_scalar_prefetch=0,
            grid=grid,
            in_specs=[
                pl.BlockSpec((bt, HW, C), lambda i: (i, 0, 0)),
                pl.BlockSpec((C, P + 1), lambda i: (0, 0)),
                pl.BlockSpec((1, P + 1), lambda i: (0, 0)),
                pl.BlockSpec((P + 1, C), lambda i: (0, 0)),
                pl.BlockSpec((P + 1, C), lambda i: (0, 0)),
            ],
            out_specs=pl.BlockSpec((bt, P + 1, C), lambda i: (i, 0, 0)),
        ),
        compiler_params=pltpu.CompilerParams(
            dimension_semantics=("parallel",)),
        cost_estimate=cost,
    )(x, wa_ext, ba_ext, scale, shift)

    return out.reshape(B, (P + 1) * C)


def reference_forward(x_nchw, wa_pc, ba, gamma, beta, mean, var):
    B, C, H, W = x_nchw.shape
    P = wa_pc.shape[0]
    x = x_nchw.reshape(B, C, H * W)                                    # (B,C,HW)
    masks = jax.nn.sigmoid(
        jnp.einsum('pc,bcs->bps', wa_pc, x) + ba[None, :, None])       # (B,P,HW)
    parts = jnp.einsum('bps,bcs->bpc', masks, x) / (H * W)             # (B,P,C)
    glob = jnp.mean(x, axis=2)[:, None, :]                             # (B,1,C)
    feats = jnp.concatenate([parts, glob], axis=1).reshape(B, -1)      # (B,(P+1)C)
    return (feats - mean) * gamma / jnp.sqrt(var + BN_EPS) + beta


if __name__ == "__main__":
    # Small, module-consistent shapes: base_dim is hard-coded to 2048 in the
    # module; spatial extent kept small.
    B, C, H, W = 2, 2048, 8, 4
    P = 6                                   # num_parts default when pattern_attention=True
    FEAT = (P + 1) * C

    key = jax.random.PRNGKey(0)
    k_x, k_w, k_g, k_m, k_v = jax.random.split(key, 5)

    # "backbone output" feature map (NCHW, as the PyTorch module would see it)
    x = jax.random.normal(k_x, (B, C, H, W), dtype=jnp.float32)

    # spatial_attention Conv2d(2048 -> 6, k=1): weight (P, C, 1, 1) squeezed to
    # (P, C); bias initialised to 0 per the module.
    wa = jax.random.normal(k_w, (P, C), dtype=jnp.float32) * 0.02
    ba = jnp.zeros((P,), dtype=jnp.float32)

    # bn_neck BatchNorm1d(FEAT): bias fixed to 0 (per module); other params
    # deterministic but non-trivial so the affine transform is exercised.
    gamma = 1.0 + 0.1 * jax.random.normal(k_g, (FEAT,), dtype=jnp.float32)
    beta = jnp.zeros((FEAT,), dtype=jnp.float32)
    mean = 0.05 * jax.random.normal(k_m, (FEAT,), dtype=jnp.float32)
    var = jnp.abs(jax.random.normal(k_v, (FEAT,), dtype=jnp.float32)) + 0.5

    out = baseline_forward(x, wa, ba, gamma, beta, mean, var)
    out = jax.block_until_ready(out)

    ref = reference_forward(x, wa, ba, gamma, beta, mean, var)
    assert out.shape == (B, FEAT), out.shape
    assert jnp.allclose(out, ref, atol=1e-3, rtol=1e-3), \
        float(jnp.max(jnp.abs(out - ref)))

    print("KERNEL_OK")
</pallas_src>

<mosaic_0001>
module attributes {stable_mosaic.version = 11 : i64} {
  func.func @_baseline_kernel(%arg0: i32, %arg1: memref<1x32x2048xf32, #tpu.memory_space<vmem>>, %arg2: memref<2048x7xf32, #tpu.memory_space<vmem>>, %arg3: memref<1x7xf32, #tpu.memory_space<vmem>>, %arg4: memref<7x2048xf32, #tpu.memory_space<vmem>>, %arg5: memref<7x2048xf32, #tpu.memory_space<vmem>>, %arg6: memref<1x7x2048xf32, #tpu.memory_space<vmem>>) attributes {dimension_semantics = [#tpu.dimension_semantics<parallel>], iteration_bounds = array<i64: 2>, scalar_prefetch = 0 : i64, scratch_operands = 0 : i64, tpu.core_type = #tpu.core_type<tc>, window_params = [{transform_indices = @transform_0, window_bounds = array<i64: 1, 32, 2048>}, {pipeline_mode = #tpu.pipeline_mode<synchronous>, transform_indices = @transform_1, window_bounds = array<i64: 2048, 7>}, {pipeline_mode = #tpu.pipeline_mode<synchronous>, transform_indices = @transform_2, window_bounds = array<i64: 1, 7>}, {pipeline_mode = #tpu.pipeline_mode<synchronous>, transform_indices = @transform_3, window_bounds = array<i64: 7, 2048>}, {pipeline_mode = #tpu.pipeline_mode<synchronous>, transform_indices = @transform_4, window_bounds = array<i64: 7, 2048>}, {transform_indices = @transform_5, window_bounds = array<i64: 1, 7, 2048>}]} {
    %c0 = arith.constant 0 : index
    %c0_0 = arith.constant 0 : index
    %c0_1 = arith.constant 0 : index
    %0 = vector.load %arg1[%c0, %c0_0, %c0_1] : memref<1x32x2048xf32, #tpu.memory_space<vmem>>, vector<1x32x2048xf32>
    %1 = vector.shape_cast %0 : vector<1x32x2048xf32> to vector<32x2048xf32>
    %c0_2 = arith.constant 0 : index
    %c0_3 = arith.constant 0 : index
    %2 = vector.load %arg2[%c0_2, %c0_3] : memref<2048x7xf32, #tpu.memory_space<vmem>>, vector<2048x7xf32>
    %cst = arith.constant dense<0.000000e+00> : vector<32x7xf32>
    %3 = tpu.matmul %1, %2, %cst {dimension_numbers = #tpu.dot_dimension_numbers<[1], [0], [0], [1], [0, 0, 1, 1], [], []>} : vector<32x2048xf32>, vector<2048x7xf32>, vector<32x7xf32> -> vector<32x7xf32>
    %c0_4 = arith.constant 0 : index
    %c0_5 = arith.constant 0 : index
    %4 = vector.load %arg3[%c0_4, %c0_5] : memref<1x7xf32, #tpu.memory_space<vmem>>, vector<1x7xf32>
    %5 = vector.broadcast %4 : vector<1x7xf32> to vector<32x7xf32>
    %6 = arith.addf %3, %5 : vector<32x7xf32>
    %7 = arith.negf %6 : vector<32x7xf32>
    %8 = math.exp %7 : vector<32x7xf32>
    %cst_6 = arith.constant 1.000000e+00 : f32
    %9 = vector.broadcast %cst_6 : f32 to vector<32x7xf32>
    %10 = arith.addf %9, %8 : vector<32x7xf32>
    %11 = arith.divf %9, %10 : vector<32x7xf32>
    %12 = vector.shape_cast %11 : vector<32x7xf32> to vector<1x32x7xf32>
    %cst_7 = arith.constant dense<0.000000e+00> : vector<1x7x2048xf32>
    %13 = tpu.matmul %12, %0, %cst_7 {dimension_numbers = #tpu.dot_dimension_numbers<[1], [1], [2], [2], [0, 0, 0, 2, 1, 2], [0], [0]>} : vector<1x32x7xf32>, vector<1x32x2048xf32>, vector<1x7x2048xf32> -> vector<1x7x2048xf32>
    %c0_8 = arith.constant 0 : index
    %c0_9 = arith.constant 0 : index
    %14 = vector.load %arg4[%c0_8, %c0_9] : memref<7x2048xf32, #tpu.memory_space<vmem>>, vector<7x2048xf32>
    %15 = vector.shape_cast %14 : vector<7x2048xf32> to vector<1x7x2048xf32>
    %16 = arith.mulf %13, %15 : vector<1x7x2048xf32>
    %c0_10 = arith.constant 0 : index
    %c0_11 = arith.constant 0 : index
    %17 = vector.load %arg5[%c0_10, %c0_11] : memref<7x2048xf32, #tpu.memory_space<vmem>>, vector<7x2048xf32>
    %18 = vector.shape_cast %17 : vector<7x2048xf32> to vector<1x7x2048xf32>
    %19 = arith.addf %16, %18 : vector<1x7x2048xf32>
    %c0_12 = arith.constant 0 : index
    %c0_13 = arith.constant 0 : index
    %c0_14 = arith.constant 0 : index
    %20 = vector.load %arg6[%c0_12, %c0_13, %c0_14] : memref<1x7x2048xf32, #tpu.memory_space<vmem>>, vector<1x7x2048xf32>
    tpu.vector_store %arg6[%c0_12, %c0_13, %c0_14], %19 {strides = array<i32>} : memref<1x7x2048xf32, #tpu.memory_space<vmem>>, vector<1x7x2048xf32>,
    return
  }
  func.func @transform_0(%arg0: i32) -> (i32, i32, i32) {
    %c0_i32 = arith.constant 0 : i32
    %c0_i32_0 = arith.constant 0 : i32
    %c0_i32_1 = arith.constant 0 : i32
    return %arg0, %c0_i32, %c0_i32_0 : i32, i32, i32
  }
  func.func @transform_1(%arg0: i32) -> (i32, i32) {
    %c0_i32 = arith.constant 0 : i32
    %c0_i32_0 = arith.constant 0 : i32
    %c0_i32_1 = arith.constant 0 : i32
    return %c0_i32, %c0_i32_0 : i32, i32
  }
  func.func @transform_2(%arg0: i32) -> (i32, i32) {
    %c0_i32 = arith.constant 0 : i32
    %c0_i32_0 = arith.constant 0 : i32
    %c0_i32_1 = arith.constant 0 : i32
    return %c0_i32, %c0_i32_0 : i32, i32
  }
  func.func @transform_3(%arg0: i32) -> (i32, i32) {
    %c0_i32 = arith.constant 0 : i32
    %c0_i32_0 = arith.constant 0 : i32
    %c0_i32_1 = arith.constant 0 : i32
    return %c0_i32, %c0_i32_0 : i32, i32
  }
  func.func @transform_4(%arg0: i32) -> (i32, i32) {
    %c0_i32 = arith.constant 0 : i32
    %c0_i32_0 = arith.constant 0 : i32
    %c0_i32_1 = arith.constant 0 : i32
    return %c0_i32, %c0_i32_0 : i32, i32
  }
  func.func @transform_5(%arg0: i32) -> (i32, i32, i32) {
    %c0_i32 = arith.constant 0 : i32
    %c0_i32_0 = arith.constant 0 : i32
    %c0_i32_1 = arith.constant 0 : i32
    return %arg0, %c0_i32, %c0_i32_0 : i32, i32, i32
  }
}

</mosaic_0001>

<llo_original>
// kernel: baseline_forward.1
$region0: #{baseline_forward.1}
  #allocation0 [shape = 'u32[]', space=smem, size = 0x4, offset = 0x4, fixed_abs, tag = 'smem constant byte address 0x4 - core index']
  #allocation1 [shape = 'u32[72,128]{1,0:T(1,128)}', space=vmem, size = 0x9000, scoped, tag = 'internal scratch']
  %s0 = inlined_call_operand.vmem [shape: f32[2,32,2048], index: 0, kind: input, shape index: {}]
  %s1 = inlined_call_operand.vmem [shape: f32[2048,7], index: 1, kind: input, shape index: {}]
  %s2 = inlined_call_operand.vmem [shape: f32[1,7], index: 2, kind: input, shape index: {}]
  %s3 = inlined_call_operand.vmem [shape: f32[7,2048], index: 3, kind: input, shape index: {}]
  %s4 = inlined_call_operand.vmem [shape: f32[7,2048], index: 4, kind: input, shape index: {}]
  %s5 = inlined_call_operand.vmem [shape: f32[2,7,2048], index: 5, kind: output, shape index: {}]
  %s6 = sld [smem:[#allocation0]]
  $region53: #{baseline_forward.1} parent=0
    _
  %s8 = ssub.s32 1, %s6
  %s9 = scalar_select 0, %s8, %s6
  loop: start=0, step=1, limit=4
  $region2: #{baseline_forward.1} parent=0 // loop_pre_header
    _
  $region3: #{baseline_forward.1} parent=0 // loop_header
    %s11 = sphi 0, %s15
    %p12 = scmp.ge.s32.totalorder %s11, 4
    %s21 = sphi 0, %s23
    %s24 = sphi 0, %s21
    %s25 = sphi 0, %s24
    %s41 = sphi 0, %s25
    %s45 = sphi 0, %s45
    %s47 = sphi 0, %s45
    %s48 = sphi 0, %s47
    %s62 = sphi 0, %s48
    %s66 = sphi 0, %s66
    %s68 = sphi 0, %s66
    %s69 = sphi 0, %s68
    %s83 = sphi 0, %s69
    %s87 = sphi 0, %s87
    %s89 = sphi 0, %s87
    %s90 = sphi 0, %s89
    %s104 = sphi 0, %s90
    %s108 = sphi 0, %s108
    %s110 = sphi 0, %s108
    %s111 = sphi 0, %s110
    %s125 = sphi 0, %s111
    %s131 = sphi 0, %s133
    %s134 = sphi 0, %s131
    %s135 = sphi 0, %s134
    %s151 = sphi 0, %s135
  $region4: #{baseline_forward.1} parent=0 // loop_header_branch
    %14 = sbr.rel (%p12) target = $region8
  $region5: #{baseline_forward.1} parent=0 // loop_body
    %s16 = ssub.s32 %s11, 1
    %s17 = ssub.s32 %s11, 2
    %s18 = sadd.s32 %s11, 1
    %s19 = ssub.s32 %s11, %s18
    %p20 = scmp.eq.s32.totalorder %s19, 0
    %s22 = sadd.s32 %s21, 1
    %s23 = scalar_select %p20, %s21, %s22
    %p26 = pneg %p20
    %p27 = scmp.eq.s32.totalorder %s11, 1
    %p28 = por %p26, %p27
    %p29 = scmp.ne.s32.totalorder %s21, %s24
    %p30 = scmp.eq.s32.totalorder %s11, 0
    %p31 = por %p29, %p30
    %p32 = scmp.ne.s32.totalorder %s21, %s24
    %p33 = scmp.eq.s32.totalorder %s16, 1
    %p34 = por %p32, %p33
    %p35 = scmp.ne.s32.totalorder %s24, %s25
    %p36 = scmp.eq.s32.totalorder %s16, 0
    %p37 = por %p35, %p36
    %p38 = scmp.ne.s32.totalorder %s24, %s25
    %p39 = scmp.eq.s32.totalorder %s17, 1
    %p40 = por %p38, %p39
    %p42 = scmp.ne.s32.totalorder %s25, %s41
    %p43 = scmp.eq.s32.totalorder %s17, 0
    %p44 = por %p42, %p43
    %s46 = sadd.s32 %s45, 1
    %p49 = scmp.eq.s32.totalorder %s11, 1
    %p50 = scmp.ne.s32.totalorder %s45, %s47
    %p51 = scmp.eq.s32.totalorder %s11, 0
    %p52 = por %p50, %p51
    %p53 = scmp.ne.s32.totalorder %s45, %s47
    %p54 = scmp.eq.s32.totalorder %s16, 1
    %p55 = por %p53, %p54
    %p56 = scmp.ne.s32.totalorder %s47, %s48
    %p57 = scmp.eq.s32.totalorder %s16, 0
    %p58 = por %p56, %p57
    %p59 = scmp.ne.s32.totalorder %s47, %s48
    %p60 = scmp.eq.s32.totalorder %s17, 1
    %p61 = por %p59, %p60
    %p63 = scmp.ne.s32.totalorder %s48, %s62
    %p64 = scmp.eq.s32.totalorder %s17, 0
    %p65 = por %p63, %p64
    %s67 = sadd.s32 %s66, 1
    %p70 = scmp.eq.s32.totalorder %s11, 1
    %p71 = scmp.ne.s32.totalorder %s66, %s68
    %p72 = scmp.eq.s32.totalorder %s11, 0
    %p73 = por %p71, %p72
    %p74 = scmp.ne.s32.totalorder %s66, %s68
    %p75 = scmp.eq.s32.totalorder %s16, 1
    %p76 = por %p74, %p75
    %p77 = scmp.ne.s32.totalorder %s68, %s69
    %p78 = scmp.eq.s32.totalorder %s16, 0
    %p79 = por %p77, %p78
    %p80 = scmp.ne.s32.totalorder %s68, %s69
    %p81 = scmp.eq.s32.totalorder %s17, 1
    %p82 = por %p80, %p81
    %p84 = scmp.ne.s32.totalorder %s69, %s83
    %p85 = scmp.eq.s32.totalorder %s17, 0
    %p86 = por %p84, %p85
    %s88 = sadd.s32 %s87, 1
    %p91 = scmp.eq.s32.totalorder %s11, 1
    %p92 = scmp.ne.s32.totalorder %s87, %s89
    %p93 = scmp.eq.s32.totalorder %s11, 0
    %p94 = por %p92, %p93
    %p95 = scmp.ne.s32.totalorder %s87, %s89
    %p96 = scmp.eq.s32.totalorder %s16, 1
    %p97 = por %p95, %p96
    %p98 = scmp.ne.s32.totalorder %s89, %s90
    %p99 = scmp.eq.s32.totalorder %s16, 0
    %p100 = por %p98, %p99
    %p101 = scmp.ne.s32.totalorder %s89, %s90
    %p102 = scmp.eq.s32.totalorder %s17, 1
    %p103 = por %p101, %p102
    %p105 = scmp.ne.s32.totalorder %s90, %s104
    %p106 = scmp.eq.s32.totalorder %s17, 0
    %p107 = por %p105, %p106
    %s109 = sadd.s32 %s108, 1
    %p112 = scmp.eq.s32.totalorder %s11, 1
    %p113 = scmp.ne.s32.totalorder %s108, %s110
    %p114 = scmp.eq.s32.totalorder %s11, 0
    %p115 = por %p113, %p114
    %p116 = scmp.ne.s32.totalorder %s108, %s110
    %p117 = scmp.eq.s32.totalorder %s16, 1
    %p118 = por %p116, %p117
    %p119 = scmp.ne.s32.totalorder %s110, %s111
    %p120 = scmp.eq.s32.totalorder %s16, 0
    %p121 = por %p119, %p120
    %p122 = scmp.ne.s32.totalorder %s110, %s111
    %p123 = scmp.eq.s32.totalorder %s17, 1
    %p124 = por %p122, %p123
    %p126 = scmp.ne.s32.totalorder %s111, %s125
    %p127 = scmp.eq.s32.totalorder %s17, 0
    %p128 = por %p126, %p127
    %s129 = ssub.s32 %s11, %s18
    %p130 = scmp.eq.s32.totalorder %s129, 0
    %s132 = sadd.s32 %s131, 1
    %s133 = scalar_select %p130, %s131, %s132
    %p136 = pneg %p130
    %p137 = scmp.eq.s32.totalorder %s11, 1
    %p138 = por %p136, %p137
    %p139 = scmp.ne.s32.totalorder %s131, %s134
    %p140 = scmp.eq.s32.totalorder %s11, 0
    %p141 = por %p139, %p140
    %p142 = scmp.ne.s32.totalorder %s131, %s134
    %p143 = scmp.eq.s32.totalorder %s16, 1
    %p144 = por %p142, %p143
    %p145 = scmp.ne.s32.totalorder %s134, %s135
    %p146 = scmp.eq.s32.totalorder %s16, 0
    %p147 = por %p145, %p146
    %p148 = scmp.ne.s32.totalorder %s134, %s135
    %p149 = scmp.eq.s32.totalorder %s17, 1
    %p150 = por %p148, %p149
    %p152 = scmp.ne.s32.totalorder %s135, %s151
    %p153 = scmp.eq.s32.totalorder %s17, 0
    %p154 = por %p152, %p153
    %p155 = scmp.le.s32.totalorder 1, %s11
    %p156 = scmp.lt.s32.totalorder %s11, 3
    %p157 = pnand %p155, %p156
    %p158 = pneg %p157
    // Predicated region
    $region9: #{baseline_forward.1} parent=5 // pred_check
      _
    $region10: #{baseline_forward.1} parent=5 // pred_check_branch
      %160 = sbr.rel (%p157) target = $region12
    $region11: #{baseline_forward.1} parent=5 // pred_region
      %s161 = ssub.s32 %s11, 1
      // Predicated region
      $region13: #{baseline_forward.1} parent=11 // pred_check
        %p162 = pneg %p58
      $region14: #{baseline_forward.1} parent=11 // pred_check_branch
        %164 = sbr.rel (%p162) target = $region16
      $region15: #{baseline_forward.1} parent=11 // pred_region
        _
      $region16: #{baseline_forward.1} parent=11 // pred_fallthru
        _
      // Predicated region
      $region17: #{baseline_forward.1} parent=11 // pred_check
        %p165 = pneg %p79
      $region18: #{baseline_forward.1} parent=11 // pred_check_branch
        %167 = sbr.rel (%p165) target = $region20
      $region19: #{baseline_forward.1} parent=11 // pred_region
        _
      $region20: #{baseline_forward.1} parent=11 // pred_fallthru
        _
      // Predicated region
      $region21: #{baseline_forward.1} parent=11 // pred_check
        %p168 = pneg %p100
      $region22: #{baseline_forward.1} parent=11 // pred_check_branch
        %170 = sbr.rel (%p168) target = $region24
      $region23: #{baseline_forward.1} parent=11 // pred_region
        _
      $region24: #{baseline_forward.1} parent=11 // pred_fallthru
        _
      // Predicated region
      $region25: #{baseline_forward.1} parent=11 // pred_check
        %p171 = pneg %p121
      $region26: #{baseline_forward.1} parent=11 // pred_check_branch
        %173 = sbr.rel (%p171) target = $region28
      $region27: #{baseline_forward.1} parent=11 // pred_region
        _
      $region28: #{baseline_forward.1} parent=11 // pred_fallthru
        _
    $region12: #{baseline_forward.1} parent=5 // pred_fallthru
      _
    %p174 = scmp.lt.s32.totalorder %s11, 2
    // Predicated region
    $region29: #{baseline_forward.1} parent=5 // pred_check
      %p175 = pneg %p174
    $region30: #{baseline_forward.1} parent=5 // pred_check_branch
      %177 = sbr.rel (%p175) target = $region32
    $region31: #{baseline_forward.1} parent=5 // pred_region
      // Predicated region
      $region33: #{baseline_forward.1} parent=31 // pred_check
        %p178 = pneg %p31
      $region34: #{baseline_forward.1} parent=31 // pred_check_branch
        %180 = sbr.rel (%p178) target = $region36
      $region35: #{baseline_forward.1} parent=31 // pred_region
        %p181 = scmp.lt.s32.totalorder %s11, 1
        %s182 = scalar_select %p181, %s11, 1
        %s183 = smul.addr %s182, 64
        %s184 = smul.addr %s183, 8
        %s185 = scalar_lea.vmem %s0, %s184
      $region36: #{baseline_forward.1} parent=31 // pred_fallthru
        _
    $region32: #{baseline_forward.1} parent=5 // pred_fallthru
      _
    %p186 = scmp.le.s32.totalorder 1, %s11
    %p187 = scmp.lt.s32.totalorder %s11, 3
    %p188 = pnand %p186, %p187
    %p189 = pneg %p188
    // Predicated region
    $region37: #{baseline_forward.1} parent=5 // pred_check
      _
    $region38: #{baseline_forward.1} parent=5 // pred_check_branch
      %191 = sbr.rel (%p188) target = $region40
    $region39: #{baseline_forward.1} parent=5 // pred_region
      %s192 = ssub.s32 %s11, 1
      %p193 = scmp.lt.s32.totalorder %s16, 1
      %s194 = scalar_select %p193, %s16, 1
      %s195 = smul.addr %s194, 64
      %s196 = smul.addr %s195, 8
      %s197 = scalar_lea.vmem %s0, %s196
      %p198 = pneg %p37
      %p199 = pneg %p34
      %p200 = pneg %p58
      %p201 = pneg %p55
      %p202 = pneg %p79
      %p203 = pneg %p76
      %p204 = pneg %p100
      %p205 = pneg %p97
      %p206 = pneg %p121
      %p207 = pneg %p118
      %p208 = pneg %p147
      %p209 = pneg %p144
      %p210 = scmp.lt.s32.totalorder %s16, 1
      %s211 = scalar_select %p210, %s16, 1
      %s212 = smul.addr %s211, 16
      %s213 = smul.addr %s212, 8
      %s214 = scalar_lea.vmem %s5, %s213
      %p215 = scmp.lt.s32.totalorder %s16, 1
      %s216 = scalar_select %p215, %s16, 1
      %s217 = smul.addr %s216, 64
      %s218 = smul.addr %s217, 8
      %s219 = scalar_lea.vmem %s0, %s218
      %p220 = scmp.lt.s32.totalorder %s16, 1
      %s221 = scalar_select %p220, %s16, 1
      %s222 = smul.addr %s221, 16
      %s223 = smul.addr %s222, 8
      %s224 = scalar_lea.vmem %s5, %s223
      %v225 = vld [vmem:[%s219] sm:$0xff]
      %v226 = vld [vmem:[%s219 + $0x8] sm:$0xff]
      %v227 = vld [vmem:[%s219 + $0x10] sm:$0xff]
      %v228 = vld [vmem:[%s219 + $0x18] sm:$0xff]
      %v229 = vld [vmem:[%s219 + $0x20] sm:$0xff]
      %v230 = vld [vmem:[%s219 + $0x28] sm:$0xff]
      %v231 = vld [vmem:[%s219 + $0x30] sm:$0xff]
      %v232 = vld [vmem:[%s219 + $0x38] sm:$0xff]
      %v233 = vld [vmem:[%s219 + $0x40] sm:$0xff]
      %v234 = vld [vmem:[%s219 + $0x48] sm:$0xff]
      %v235 = vld [vmem:[%s219 + $0x50] sm:$0xff]
      %v236 = vld [vmem:[%s219 + $0x58] sm:$0xff]
      %v237 = vld [vmem:[%s219 + $0x60] sm:$0xff]
      %v238 = vld [vmem:[%s219 + $0x68] sm:$0xff]
      %v239 = vld [vmem:[%s219 + $0x70] sm:$0xff]
      %v240 = vld [vmem:[%s219 + $0x78] sm:$0xff]
      %v241 = vld [vmem:[%s219 + $0x80] sm:$0xff]
      %v242 = vld [vmem:[%s219 + $0x88] sm:$0xff]
      %v243 = vld [vmem:[%s219 + $0x90] sm:$0xff]
      %v244 = vld [vmem:[%s219 + $0x98] sm:$0xff]
      %v245 = vld [vmem:[%s219 + $0xa0] sm:$0xff]
      %v246 = vld [vmem:[%s219 + $0xa8] sm:$0xff]
      %v247 = vld [vmem:[%s219 + $0xb0] sm:$0xff]
      %v248 = vld [vmem:[%s219 + $0xb8] sm:$0xff]
      %v249 = vld [vmem:[%s219 + $0xc0] sm:$0xff]
      %v250 = vld [vmem:[%s219 + $0xc8] sm:$0xff]
      %v251 = vld [vmem:[%s219 + $0xd0] sm:$0xff]
      %v252 = vld [vmem:[%s219 + $0xd8] sm:$0xff]
      %v253 = vld [vmem:[%s219 + $0xe0] sm:$0xff]
      %v254 = vld [vmem:[%s219 + $0xe8] sm:$0xff]
      %v255 = vld [vmem:[%s219 + $0xf0] sm:$0xff]
      %v256 = vld [vmem:[%s219 + $0xf8] sm:$0xff]
      %v257 = vld [vmem:[%s219 + $0x100] sm:$0xff]
      %v258 = vld [vmem:[%s219 + $0x108] sm:$0xff]
      %v259 = vld [vmem:[%s219 + $0x110] sm:$0xff]
      %v260 = vld [vmem:[%s219 + $0x118] sm:$0xff]
      %v261 = vld [vmem:[%s219 + $0x120] sm:$0xff]
      %v262 = vld [vmem:[%s219 + $0x128] sm:$0xff]
      %v263 = vld [vmem:[%s219 + $0x130] sm:$0xff]
      %v264 = vld [vmem:[%s219 + $0x138] sm:$0xff]
      %v265 = vld [vmem:[%s219 + $0x140] sm:$0xff]
      %v266 = vld [vmem:[%s219 + $0x148] sm:$0xff]
      %v267 = vld [vmem:[%s219 + $0x150] sm:$0xff]
      %v268 = vld [vmem:[%s219 + $0x158] sm:$0xff]
      %v269 = vld [vmem:[%s219 + $0x160] sm:$0xff]
      %v270 = vld [vmem:[%s219 + $0x168] sm:$0xff]
      %v271 = vld [vmem:[%s219 + $0x170] sm:$0xff]
      %v272 = vld [vmem:[%s219 + $0x178] sm:$0xff]
      %v273 = vld [vmem:[%s219 + $0x180] sm:$0xff]
      %v274 = vld [vmem:[%s219 + $0x188] sm:$0xff]
      %v275 = vld [vmem:[%s219 + $0x190] sm:$0xff]
      %v276 = vld [vmem:[%s219 + $0x198] sm:$0xff]
      %v277 = vld [vmem:[%s219 + $0x1a0] sm:$0xff]
      %v278 = vld [vmem:[%s219 + $0x1a8] sm:$0xff]
      %v279 = vld [vmem:[%s219 + $0x1b0] sm:$0xff]
      %v280 = vld [vmem:[%s219 + $0x1b8] sm:$0xff]
      %v281 = vld [vmem:[%s219 + $0x1c0] sm:$0xff]
      %v282 = vld [vmem:[%s219 + $0x1c8] sm:$0xff]
      %v283 = vld [vmem:[%s219 + $0x1d0] sm:$0xff]
      %v284 = vld [vmem:[%s219 + $0x1d8] sm:$0xff]
      %v285 = vld [vmem:[%s219 + $0x1e0] sm:$0xff]
      %v286 = vld [vmem:[%s219 + $0x1e8] sm:$0xff]
      %v287 = vld [vmem:[%s219 + $0x1f0] sm:$0xff]
      %v288 = vld [vmem:[%s219 + $0x1f8] sm:$0xff]
      %v289 = vld [vmem:[%s1] sm:$0xff]
      %v290 = vld [vmem:[%s1 + $0x8] sm:$0xff]
      %v291 = vld [vmem:[%s1 + $0x10] sm:$0xff]
      %v292 = vld [vmem:[%s1 + $0x18] sm:$0xff]
      %v293 = vld [vmem:[%s1 + $0x20] sm:$0xff]
      %v294 = vld [vmem:[%s1 + $0x28] sm:$0xff]
      %v295 = vld [vmem:[%s1 + $0x30] sm:$0xff]
      %v296 = vld [vmem:[%s1 + $0x38] sm:$0xff]
      %v297 = vld [vmem:[%s1 + $0x40] sm:$0xff]
      %v298 = vld [vmem:[%s1 + $0x48] sm:$0xff]
      %v299 = vld [vmem:[%s1 + $0x50] sm:$0xff]
      %v300 = vld [vmem:[%s1 + $0x58] sm:$0xff]
      %v301 = vld [vmem:[%s1 + $0x60] sm:$0xff]
      %v302 = vld [vmem:[%s1 + $0x68] sm:$0xff]
      %v303 = vld [vmem:[%s1 + $0x70] sm:$0xff]
      %v304 = vld [vmem:[%s1 + $0x78] sm:$0xff]
      %v305 = vld [vmem:[%s1 + $0x80] sm:$0xff]
      %v306 = vld [vmem:[%s1 + $0x88] sm:$0xff]
      %v307 = vld [vmem:[%s1 + $0x90] sm:$0xff]
      %v308 = vld [vmem:[%s1 + $0x98] sm:$0xff]
      %v309 = vld [vmem:[%s1 + $0xa0] sm:$0xff]
      %v310 = vld [vmem:[%s1 + $0xa8] sm:$0xff]
      %v311 = vld [vmem:[%s1 + $0xb0] sm:$0xff]
      %v312 = vld [vmem:[%s1 + $0xb8] sm:$0xff]
      %v313 = vld [vmem:[%s1 + $0xc0] sm:$0xff]
      %v314 = vld [vmem:[%s1 + $0xc8] sm:$0xff]
      %v315 = vld [vmem:[%s1 + $0xd0] sm:$0xff]
      %v316 = vld [vmem:[%s1 + $0xd8] sm:$0xff]
      %v317 = vld [vmem:[%s1 + $0xe0] sm:$0xff]
      %v318 = vld [vmem:[%s1 + $0xe8] sm:$0xff]
      %v319 = vld [vmem:[%s1 + $0xf0] sm:$0xff]
      %v320 = vld [vmem:[%s1 + $0xf8] sm:$0xff]
      %v321 = vld [vmem:[%s1 + $0x100] sm:$0xff]
      %v322 = vld [vmem:[%s1 + $0x108] sm:$0xff]
      %v323 = vld [vmem:[%s1 + $0x110] sm:$0xff]
      %v324 = vld [vmem:[%s1 + $0x118] sm:$0xff]
      %v325 = vld [vmem:[%s1 + $0x120] sm:$0xff]
      %v326 = vld [vmem:[%s1 + $0x128] sm:$0xff]
      %v327 = vld [vmem:[%s1 + $0x130] sm:$0xff]
      %v328 = vld [vmem:[%s1 + $0x138] sm:$0xff]
      %v329 = vld [vmem:[%s1 + $0x140] sm:$0xff]
      %v330 = vld [vmem:[%s1 + $0x148] sm:$0xff]
      %v331 = vld [vmem:[%s1 + $0x150] sm:$0xff]
      %v332 = vld [vmem:[%s1 + $0x158] sm:$0xff]
      %v333 = vld [vmem:[%s1 + $0x160] sm:$0xff]
      %v334 = vld [vmem:[%s1 + $0x168] sm:$0xff]
      %v335 = vld [vmem:[%s1 + $0x170] sm:$0xff]
      %v336 = vld [vmem:[%s1 + $0x178] sm:$0xff]
      %v337 = vld [vmem:[%s1 + $0x180] sm:$0xff]
      %v338 = vld [vmem:[%s1 + $0x188] sm:$0xff]
      %v339 = vld [vmem:[%s1 + $0x190] sm:$0xff]
      %v340 = vld [vmem:[%s1 + $0x198] sm:$0xff]
      %v341 = vld [vmem:[%s1 + $0x1a0] sm:$0xff]
      %v342 = vld [vmem:[%s1 + $0x1a8] sm:$0xff]
      %v343 = vld [vmem:[%s1 + $0x1b0] sm:$0xff]
      %v344 = vld [vmem:[%s1 + $0x1b8] sm:$0xff]
      %v345 = vld [vmem:[%s1 + $0x1c0] sm:$0xff]
      %v346 = vld [vmem:[%s1 + $0x1c8] sm:$0xff]
      %v347 = vld [vmem:[%s1 + $0x1d0] sm:$0xff]
      %v348 = vld [vmem:[%s1 + $0x1d8] sm:$0xff]
      %v349 = vld [vmem:[%s1 + $0x1e0] sm:$0xff]
      %v350 = vld [vmem:[%s1 + $0x1e8] sm:$0xff]
      %v351 = vld [vmem:[%s1 + $0x1f0] sm:$0xff]
      %v352 = vld [vmem:[%s1 + $0x1f8] sm:$0xff]
      %v353 = vld [vmem:[%s1 + $0x200] sm:$0xff]
      %v354 = vld [vmem:[%s1 + $0x208] sm:$0xff]
      %v355 = vld [vmem:[%s1 + $0x210] sm:$0xff]
      %v356 = vld [vmem:[%s1 + $0x218] sm:$0xff]
      %v357 = vld [vmem:[%s1 + $0x220] sm:$0xff]
      %v358 = vld [vmem:[%s1 + $0x228] sm:$0xff]
      %v359 = vld [vmem:[%s1 + $0x230] sm:$0xff]
      %v360 = vld [vmem:[%s1 + $0x238] sm:$0xff]
      %v361 = vld [vmem:[%s1 + $0x240] sm:$0xff]
      %v362 = vld [vmem:[%s1 + $0x248] sm:$0xff]
      %v363 = vld [vmem:[%s1 + $0x250] sm:$0xff]
      %v364 = vld [vmem:[%s1 + $0x258] sm:$0xff]
      %v365 = vld [vmem:[%s1 + $0x260] sm:$0xff]
      %v366 = vld [vmem:[%s1 + $0x268] sm:$0xff]
      %v367 = vld [vmem:[%s1 + $0x270] sm:$0xff]
      %v368 = vld [vmem:[%s1 + $0x278] sm:$0xff]
      %v369 = vld [vmem:[%s1 + $0x280] sm:$0xff]
      %v370 = vld [vmem:[%s1 + $0x288] sm:$0xff]
      %v371 = vld [vmem:[%s1 + $0x290] sm:$0xff]
      %v372 = vld [vmem:[%s1 + $0x298] sm:$0xff]
      %v373 = vld [vmem:[%s1 + $0x2a0] sm:$0xff]
      %v374 = vld [vmem:[%s1 + $0x2a8] sm:$0xff]
      %v375 = vld [vmem:[%s1 + $0x2b0] sm:$0xff]
      %v376 = vld [vmem:[%s1 + $0x2b8] sm:$0xff]
      %v377 = vld [vmem:[%s1 + $0x2c0] sm:$0xff]
      %v378 = vld [vmem:[%s1 + $0x2c8] sm:$0xff]
      %v379 = vld [vmem:[%s1 + $0x2d0] sm:$0xff]
      %v380 = vld [vmem:[%s1 + $0x2d8] sm:$0xff]
      %v381 = vld [vmem:[%s1 + $0x2e0] sm:$0xff]
      %v382 = vld [vmem:[%s1 + $0x2e8] sm:$0xff]
      %v383 = vld [vmem:[%s1 + $0x2f0] sm:$0xff]
      %v384 = vld [vmem:[%s1 + $0x2f8] sm:$0xff]
      %v385 = vld [vmem:[%s1 + $0x300] sm:$0xff]
      %v386 = vld [vmem:[%s1 + $0x308] sm:$0xff]
      %v387 = vld [vmem:[%s1 + $0x310] sm:$0xff]
      %v388 = vld [vmem:[%s1 + $0x318] sm:$0xff]
      %v389 = vld [vmem:[%s1 + $0x320] sm:$0xff]
      %v390 = vld [vmem:[%s1 + $0x328] sm:$0xff]
      %v391 = vld [vmem:[%s1 + $0x330] sm:$0xff]
      %v392 = vld [vmem:[%s1 + $0x338] sm:$0xff]
      %v393 = vld [vmem:[%s1 + $0x340] sm:$0xff]
      %v394 = vld [vmem:[%s1 + $0x348] sm:$0xff]
      %v395 = vld [vmem:[%s1 + $0x350] sm:$0xff]
      %v396 = vld [vmem:[%s1 + $0x358] sm:$0xff]
      %v397 = vld [vmem:[%s1 + $0x360] sm:$0xff]
      %v398 = vld [vmem:[%s1 + $0x368] sm:$0xff]
      %v399 = vld [vmem:[%s1 + $0x370] sm:$0xff]
      %v400 = vld [vmem:[%s1 + $0x378] sm:$0xff]
      %v401 = vld [vmem:[%s1 + $0x380] sm:$0xff]
      %v402 = vld [vmem:[%s1 + $0x388] sm:$0xff]
      %v403 = vld [vmem:[%s1 + $0x390] sm:$0xff]
      %v404 = vld [vmem:[%s1 + $0x398] sm:$0xff]
      %v405 = vld [vmem:[%s1 + $0x3a0] sm:$0xff]
      %v406 = vld [vmem:[%s1 + $0x3a8] sm:$0xff]
      %v407 = vld [vmem:[%s1 + $0x3b0] sm:$0xff]
      %v408 = vld [vmem:[%s1 + $0x3b8] sm:$0xff]
      %v409 = vld [vmem:[%s1 + $0x3c0] sm:$0xff]
      %v410 = vld [vmem:[%s1 + $0x3c8] sm:$0xff]
      %v411 = vld [vmem:[%s1 + $0x3d0] sm:$0xff]
      %v412 = vld [vmem:[%s1 + $0x3d8] sm:$0xff]
      %v413 = vld [vmem:[%s1 + $0x3e0] sm:$0xff]
      %v414 = vld [vmem:[%s1 + $0x3e8] sm:$0xff]
      %v415 = vld [vmem:[%s1 + $0x3f0] sm:$0xff]
      %v416 = vld [vmem:[%s1 + $0x3f8] sm:$0xff]
      %v417 = vld [vmem:[%s1 + $0x400] sm:$0xff]
      %v418 = vld [vmem:[%s1 + $0x408] sm:$0xff]
      %v419 = vld [vmem:[%s1 + $0x410] sm:$0xff]
      %v420 = vld [vmem:[%s1 + $0x418] sm:$0xff]
      %v421 = vld [vmem:[%s1 + $0x420] sm:$0xff]
      %v422 = vld [vmem:[%s1 + $0x428] sm:$0xff]
      %v423 = vld [vmem:[%s1 + $0x430] sm:$0xff]
      %v424 = vld [vmem:[%s1 + $0x438] sm:$0xff]
      %v425 = vld [vmem:[%s1 + $0x440] sm:$0xff]
      %v426 = vld [vmem:[%s1 + $0x448] sm:$0xff]
      %v427 = vld [vmem:[%s1 + $0x450] sm:$0xff]
      %v428 = vld [vmem:[%s1 + $0x458] sm:$0xff]
      %v429 = vld [vmem:[%s1 + $0x460] sm:$0xff]
      %v430 = vld [vmem:[%s1 + $0x468] sm:$0xff]
      %v431 = vld [vmem:[%s1 + $0x470] sm:$0xff]
      %v432 = vld [vmem:[%s1 + $0x478] sm:$0xff]
      %v433 = vld [vmem:[%s1 + $0x480] sm:$0xff]
      %v434 = vld [vmem:[%s1 + $0x488] sm:$0xff]
      %v435 = vld [vmem:[%s1 + $0x490] sm:$0xff]
      %v436 = vld [vmem:[%s1 + $0x498] sm:$0xff]
      %v437 = vld [vmem:[%s1 + $0x4a0] sm:$0xff]
      %v438 = vld [vmem:[%s1 + $0x4a8] sm:$0xff]
      %v439 = vld [vmem:[%s1 + $0x4b0] sm:$0xff]
      %v440 = vld [vmem:[%s1 + $0x4b8] sm:$0xff]
      %v441 = vld [vmem:[%s1 + $0x4c0] sm:$0xff]
      %v442 = vld [vmem:[%s1 + $0x4c8] sm:$0xff]
      %v443 = vld [vmem:[%s1 + $0x4d0] sm:$0xff]
      %v444 = vld [vmem:[%s1 + $0x4d8] sm:$0xff]
      %v445 = vld [vmem:[%s1 + $0x4e0] sm:$0xff]
      %v446 = vld [vmem:[%s1 + $0x4e8] sm:$0xff]
      %v447 = vld [vmem:[%s1 + $0x4f0] sm:$0xff]
      %v448 = vld [vmem:[%s1 + $0x4f8] sm:$0xff]
      %v449 = vld [vmem:[%s1 + $0x500] sm:$0xff]
      %v450 = vld [vmem:[%s1 + $0x508] sm:$0xff]
      %v451 = vld [vmem:[%s1 + $0x510] sm:$0xff]
      %v452 = vld [vmem:[%s1 + $0x518] sm:$0xff]
      %v453 = vld [vmem:[%s1 + $0x520] sm:$0xff]
      %v454 = vld [vmem:[%s1 + $0x528] sm:$0xff]
      %v455 = vld [vmem:[%s1 + $0x530] sm:$0xff]
      %v456 = vld [vmem:[%s1 + $0x538] sm:$0xff]
      %v457 = vld [vmem:[%s1 + $0x540] sm:$0xff]
      %v458 = vld [vmem:[%s1 + $0x548] sm:$0xff]
      %v459 = vld [vmem:[%s1 + $0x550] sm:$0xff]
      %v460 = vld [vmem:[%s1 + $0x558] sm:$0xff]
      %v461 = vld [vmem:[%s1 + $0x560] sm:$0xff]
      %v462 = vld [vmem:[%s1 + $0x568] sm:$0xff]
      %v463 = vld [vmem:[%s1 + $0x570] sm:$0xff]
      %v464 = vld [vmem:[%s1 + $0x578] sm:$0xff]
      %v465 = vld [vmem:[%s1 + $0x580] sm:$0xff]
      %v466 = vld [vmem:[%s1 + $0x588] sm:$0xff]
      %v467 = vld [vmem:[%s1 + $0x590] sm:$0xff]
      %v468 = vld [vmem:[%s1 + $0x598] sm:$0xff]
      %v469 = vld [vmem:[%s1 + $0x5a0] sm:$0xff]
      %v470 = vld [vmem:[%s1 + $0x5a8] sm:$0xff]
      %v471 = vld [vmem:[%s1 + $0x5b0] sm:$0xff]
      %v472 = vld [vmem:[%s1 + $0x5b8] sm:$0xff]
      %v473 = vld [vmem:[%s1 + $0x5c0] sm:$0xff]
      %v474 = vld [vmem:[%s1 + $0x5c8] sm:$0xff]
      %v475 = vld [vmem:[%s1 + $0x5d0] sm:$0xff]
      %v476 = vld [vmem:[%s1 + $0x5d8] sm:$0xff]
      %v477 = vld [vmem:[%s1 + $0x5e0] sm:$0xff]
      %v478 = vld [vmem:[%s1 + $0x5e8] sm:$0xff]
      %v479 = vld [vmem:[%s1 + $0x5f0] sm:$0xff]
      %v480 = vld [vmem:[%s1 + $0x5f8] sm:$0xff]
      %v481 = vld [vmem:[%s1 + $0x600] sm:$0xff]
      %v482 = vld [vmem:[%s1 + $0x608] sm:$0xff]
      %v483 = vld [vmem:[%s1 + $0x610] sm:$0xff]
      %v484 = vld [vmem:[%s1 + $0x618] sm:$0xff]
      %v485 = vld [vmem:[%s1 + $0x620] sm:$0xff]
      %v486 = vld [vmem:[%s1 + $0x628] sm:$0xff]
      %v487 = vld [vmem:[%s1 + $0x630] sm:$0xff]
      %v488 = vld [vmem:[%s1 + $0x638] sm:$0xff]
      %v489 = vld [vmem:[%s1 + $0x640] sm:$0xff]
      %v490 = vld [vmem:[%s1 + $0x648] sm:$0xff]
      %v491 = vld [vmem:[%s1 + $0x650] sm:$0xff]
      %v492 = vld [vmem:[%s1 + $0x658] sm:$0xff]
      %v493 = vld [vmem:[%s1 + $0x660] sm:$0xff]
      %v494 = vld [vmem:[%s1 + $0x668] sm:$0xff]
      %v495 = vld [vmem:[%s1 + $0x670] sm:$0xff]
      %v496 = vld [vmem:[%s1 + $0x678] sm:$0xff]
      %v497 = vld [vmem:[%s1 + $0x680] sm:$0xff]
      %v498 = vld [vmem:[%s1 + $0x688] sm:$0xff]
      %v499 = vld [vmem:[%s1 + $0x690] sm:$0xff]
      %v500 = vld [vmem:[%s1 + $0x698] sm:$0xff]
      %v501 = vld [vmem:[%s1 + $0x6a0] sm:$0xff]
      %v502 = vld [vmem:[%s1 + $0x6a8] sm:$0xff]
      %v503 = vld [vmem:[%s1 + $0x6b0] sm:$0xff]
      %v504 = vld [vmem:[%s1 + $0x6b8] sm:$0xff]
      %v505 = vld [vmem:[%s1 + $0x6c0] sm:$0xff]
      %v506 = vld [vmem:[%s1 + $0x6c8] sm:$0xff]
      %v507 = vld [vmem:[%s1 + $0x6d0] sm:$0xff]
      %v508 = vld [vmem:[%s1 + $0x6d8] sm:$0xff]
      %v509 = vld [vmem:[%s1 + $0x6e0] sm:$0xff]
      %v510 = vld [vmem:[%s1 + $0x6e8] sm:$0xff]
      %v511 = vld [vmem:[%s1 + $0x6f0] sm:$0xff]
      %v512 = vld [vmem:[%s1 + $0x6f8] sm:$0xff]
      %v513 = vld [vmem:[%s1 + $0x700] sm:$0xff]
      %v514 = vld [vmem:[%s1 + $0x708] sm:$0xff]
      %v515 = vld [vmem:[%s1 + $0x710] sm:$0xff]
      %v516 = vld [vmem:[%s1 + $0x718] sm:$0xff]
      %v517 = vld [vmem:[%s1 + $0x720] sm:$0xff]
      %v518 = vld [vmem:[%s1 + $0x728] sm:$0xff]
      %v519 = vld [vmem:[%s1 + $0x730] sm:$0xff]
      %v520 = vld [vmem:[%s1 + $0x738] sm:$0xff]
      %v521 = vld [vmem:[%s1 + $0x740] sm:$0xff]
      %v522 = vld [vmem:[%s1 + $0x748] sm:$0xff]
      %v523 = vld [vmem:[%s1 + $0x750] sm:$0xff]
      %v524 = vld [vmem:[%s1 + $0x758] sm:$0xff]
      %v525 = vld [vmem:[%s1 + $0x760] sm:$0xff]
      %v526 = vld [vmem:[%s1 + $0x768] sm:$0xff]
      %v527 = vld [vmem:[%s1 + $0x770] sm:$0xff]
      %v528 = vld [vmem:[%s1 + $0x778] sm:$0xff]
      %v529 = vld [vmem:[%s1 + $0x780] sm:$0xff]
      %v530 = vld [vmem:[%s1 + $0x788] sm:$0xff]
      %v531 = vld [vmem:[%s1 + $0x790] sm:$0xff]
      %v532 = vld [vmem:[%s1 + $0x798] sm:$0xff]
      %v533 = vld [vmem:[%s1 + $0x7a0] sm:$0xff]
      %v534 = vld [vmem:[%s1 + $0x7a8] sm:$0xff]
      %v535 = vld [vmem:[%s1 + $0x7b0] sm:$0xff]
      %v536 = vld [vmem:[%s1 + $0x7b8] sm:$0xff]
      %v537 = vld [vmem:[%s1 + $0x7c0] sm:$0xff]
      %v538 = vld [vmem:[%s1 + $0x7c8] sm:$0xff]
      %v539 = vld [vmem:[%s1 + $0x7d0] sm:$0xff]
      %v540 = vld [vmem:[%s1 + $0x7d8] sm:$0xff]
      %v541 = vld [vmem:[%s1 + $0x7e0] sm:$0xff]
      %v542 = vld [vmem:[%s1 + $0x7e8] sm:$0xff]
      %v543 = vld [vmem:[%s1 + $0x7f0] sm:$0xff]
      %v544 = vld [vmem:[%s1 + $0x7f8] sm:$0xff]
      %v545 = vld [vmem:[%s2] sm:$0x1]
      %v547 = vperm.slane %v545, 0
      %549 = vmatpush.msra.mxu0 %v304
      %550 = vmatpush.msra.mxu0 %v303
      %551 = vmatpush.msra.mxu0 %v302
      %552 = vmatpush.msra.mxu0 %v301
      %553 = vmatpush.msra.mxu0 %v300
      %554 = vmatpush.msra.mxu0 %v299
      %555 = vmatpush.msra.mxu0 %v298
      %556 = vmatpush.msra.mxu0 %v297
      %557 = vmatpush.msra.mxu0 %v296
      %558 = vmatpush.msra.mxu0 %v295
      %559 = vmatpush.msra.mxu0 %v294
      %560 = vmatpush.msra.mxu0 %v293
      %561 = vmatpush.msra.mxu0 %v292
      %562 = vmatpush.msra.mxu0 %v291
      %563 = vmatpush.msra.mxu0 %v290
      %564 = vmatpush.msra.mxu0 %v289
      %565 = vmatmul.f32.gmra.mxu0 %v225
      %v566 = vpop.f32.mrf.mxu0
      %v567 = vadd.f32 %v547, %v566
      %568 = vmatmul.f32.gmra.mxu0 %v241
      %v569 = vpop.f32.mrf.mxu0
      %v570 = vadd.f32 %v547, %v569
      %571 = vmatmul.f32.gmra.mxu0 %v257
      %v572 = vpop.f32.mrf.mxu0
      %v573 = vadd.f32 %v547, %v572
      %574 = vmatmul.f32.gmra.mxu0 %v273
      %v575 = vpop.f32.mrf.mxu0
      %v576 = vadd.f32 %v547, %v575
      %577 = vdwg.mxu0
      %578 = vmatpush.msra.mxu0 %v320
      %579 = vmatpush.msra.mxu0 %v319
      %580 = vmatpush.msra.mxu0 %v318
      %581 = vmatpush.msra.mxu0 %v317
      %582 = vmatpush.msra.mxu0 %v316
      %583 = vmatpush.msra.mxu0 %v315
      %584 = vmatpush.msra.mxu0 %v314
      %585 = vmatpush.msra.mxu0 %v313
      %586 = vmatpush.msra.mxu0 %v312
      %587 = vmatpush.msra.mxu0 %v311
      %588 = vmatpush.msra.mxu0 %v310
      %589 = vmatpush.msra.mxu0 %v309
      %590 = vmatpush.msra.mxu0 %v308
      %591 = vmatpush.msra.mxu0 %v307
      %592 = vmatpush.msra.mxu0 %v306
      %593 = vmatpush.msra.mxu0 %v305
      %594 = vmatmul.f32.gmra.mxu0 %v226
      %v595 = vpop.f32.mrf.mxu0
      %v596 = vadd.f32 %v567, %v595
      %597 = vmatmul.f32.gmra.mxu0 %v242
      %v598 = vpop.f32.mrf.mxu0
      %v599 = vadd.f32 %v570, %v598
      %600 = vmatmul.f32.gmra.mxu0 %v258
      %v601 = vpop.f32.mrf.mxu0
      %v602 = vadd.f32 %v573, %v601
      %603 = vmatmul.f32.gmra.mxu0 %v274
      %v604 = vpop.f32.mrf.mxu0
      %v605 = vadd.f32 %v576, %v604
      %606 = vdwg.mxu0
      %607 = vmatpush.msra.mxu0 %v336
      %608 = vmatpush.msra.mxu0 %v335
      %609 = vmatpush.msra.mxu0 %v334
      %610 = vmatpush.msra.mxu0 %v333
      %611 = vmatpush.msra.mxu0 %v332
      %612 = vmatpush.msra.mxu0 %v331
      %613 = vmatpush.msra.mxu0 %v330
      %614 = vmatpush.msra.mxu0 %v329
      %615 = vmatpush.msra.mxu0 %v328
      %616 = vmatpush.msra.mxu0 %v327
      %617 = vmatpush.msra.mxu0 %v326
      %618 = vmatpush.msra.mxu0 %v325
      %619 = vmatpush.msra.mxu0 %v324
      %620 = vmatpush.msra.mxu0 %v323
      %621 = vmatpush.msra.mxu0 %v322
      %622 = vmatpush.msra.mxu0 %v321
      %623 = vmatmul.f32.gmra.mxu0 %v227
      %v624 = vpop.f32.mrf.mxu0
      %v625 = vadd.f32 %v596, %v624
      %626 = vmatmul.f32.gmra.mxu0 %v243
      %v627 = vpop.f32.mrf.mxu0
      %v628 = vadd.f32 %v599, %v627
      %629 = vmatmul.f32.gmra.mxu0 %v259
      %v630 = vpop.f32.mrf.mxu0
      %v631 = vadd.f32 %v602, %v630
      %632 = vmatmul.f32.gmra.mxu0 %v275
      %v633 = vpop.f32.mrf.mxu0
      %v634 = vadd.f32 %v605, %v633
      %635 = vdwg.mxu0
      %636 = vmatpush.msra.mxu0 %v352
      %637 = vmatpush.msra.mxu0 %v351
      %638 = vmatpush.msra.mxu0 %v350
      %639 = vmatpush.msra.mxu0 %v349
      %640 = vmatpush.msra.mxu0 %v348
      %641 = vmatpush.msra.mxu0 %v347
      %642 = vmatpush.msra.mxu0 %v346
      %643 = vmatpush.msra.mxu0 %v345
      %644 = vmatpush.msra.mxu0 %v344
      %645 = vmatpush.msra.mxu0 %v343
      %646 = vmatpush.msra.mxu0 %v342
      %647 = vmatpush.msra.mxu0 %v341
      %648 = vmatpush.msra.mxu0 %v340
      %649 = vmatpush.msra.mxu0 %v339
      %650 = vmatpush.msra.mxu0 %v338
      %651 = vmatpush.msra.mxu0 %v337
      %652 = vmatmul.f32.gmra.mxu0 %v228
      %v653 = vpop.f32.mrf.mxu0
      %v654 = vadd.f32 %v625, %v653
      %655 = vmatmul.f32.gmra.mxu0 %v244
      %v656 = vpop.f32.mrf.mxu0
      %v657 = vadd.f32 %v628, %v656
      %658 = vmatmul.f32.gmra.mxu0 %v260
      %v659 = vpop.f32.mrf.mxu0
      %v660 = vadd.f32 %v631, %v659
      %661 = vmatmul.f32.gmra.mxu0 %v276
      %v662 = vpop.f32.mrf.mxu0
      %v663 = vadd.f32 %v634, %v662
      %664 = vdwg.mxu0
      %665 = vmatpush.msra.mxu0 %v368
      %666 = vmatpush.msra.mxu0 %v367
      %667 = vmatpush.msra.mxu0 %v366
      %668 = vmatpush.msra.mxu0 %v365
      %669 = vmatpush.msra.mxu0 %v364
      %670 = vmatpush.msra.mxu0 %v363
      %671 = vmatpush.msra.mxu0 %v362
      %672 = vmatpush.msra.mxu0 %v361
      %673 = vmatpush.msra.mxu0 %v360
      %674 = vmatpush.msra.mxu0 %v359
      %675 = vmatpush.msra.mxu0 %v358
      %676 = vmatpush.msra.mxu0 %v357
      %677 = vmatpush.msra.mxu0 %v356
      %678 = vmatpush.msra.mxu0 %v355
      %679 = vmatpush.msra.mxu0 %v354
      %680 = vmatpush.msra.mxu0 %v353
      %681 = vmatmul.f32.gmra.mxu0 %v229
      %v682 = vpop.f32.mrf.mxu0
      %v683 = vadd.f32 %v654, %v682
      %684 = vmatmul.f32.gmra.mxu0 %v245
      %v685 = vpop.f32.mrf.mxu0
      %v686 = vadd.f32 %v657, %v685
      %687 = vmatmul.f32.gmra.mxu0 %v261
      %v688 = vpop.f32.mrf.mxu0
      %v689 = vadd.f32 %v660, %v688
      %690 = vmatmul.f32.gmra.mxu0 %v277
      %v691 = vpop.f32.mrf.mxu0
      %v692 = vadd.f32 %v663, %v691
      %693 = vdwg.mxu0
      %694 = vmatpush.msra.mxu0 %v384
      %695 = vmatpush.msra.mxu0 %v383
      %696 = vmatpush.msra.mxu0 %v382
      %697 = vmatpush.msra.mxu0 %v381
      %698 = vmatpush.msra.mxu0 %v380
      %699 = vmatpush.msra.mxu0 %v379
      %700 = vmatpush.msra.mxu0 %v378
      %701 = vmatpush.msra.mxu0 %v377
      %702 = vmatpush.msra.mxu0 %v376
      %703 = vmatpush.msra.mxu0 %v375
      %704 = vmatpush.msra.mxu0 %v374
      %705 = vmatpush.msra.mxu0 %v373
      %706 = vmatpush.msra.mxu0 %v372
      %707 = vmatpush.msra.mxu0 %v371
      %708 = vmatpush.msra.mxu0 %v370
      %709 = vmatpush.msra.mxu0 %v369
      %710 = vmatmul.f32.gmra.mxu0 %v230
      %v711 = vpop.f32.mrf.mxu0
      %v712 = vadd.f32 %v683, %v711
      %713 = vmatmul.f32.gmra.mxu0 %v246
      %v714 = vpop.f32.mrf.mxu0
      %v715 = vadd.f32 %v686, %v714
      %716 = vmatmul.f32.gmra.mxu0 %v262
      %v717 = vpop.f32.mrf.mxu0
      %v718 = vadd.f32 %v689, %v717
      %719 = vmatmul.f32.gmra.mxu0 %v278
      %v720 = vpop.f32.mrf.mxu0
      %v721 = vadd.f32 %v692, %v720
      %722 = vdwg.mxu0
      %723 = vmatpush.msra.mxu0 %v400
      %724 = vmatpush.msra.mxu0 %v399
      %725 = vmatpush.msra.mxu0 %v398
      %726 = vmatpush.msra.mxu0 %v397
      %727 = vmatpush.msra.mxu0 %v396
      %728 = vmatpush.msra.mxu0 %v395
      %729 = vmatpush.msra.mxu0 %v394
      %730 = vmatpush.msra.mxu0 %v393
      %731 = vmatpush.msra.mxu0 %v392
      %732 = vmatpush.msra.mxu0 %v391
      %733 = vmatpush.msra.mxu0 %v390
      %734 = vmatpush.msra.mxu0 %v389
      %735 = vmatpush.msra.mxu0 %v388
      %736 = vmatpush.msra.mxu0 %v387
      %737 = vmatpush.msra.mxu0 %v386
      %738 = vmatpush.msra.mxu0 %v385
      %739 = vmatmul.f32.gmra.mxu0 %v231
      %v740 = vpop.f32.mrf.mxu0
      %v741 = vadd.f32 %v712, %v740
      %742 = vmatmul.f32.gmra.mxu0 %v247
      %v743 = vpop.f32.mrf.mxu0
      %v744 = vadd.f32 %v715, %v743
      %745 = vmatmul.f32.gmra.mxu0 %v263
      %v746 = vpop.f32.mrf.mxu0
      %v747 = vadd.f32 %v718, %v746
      %748 = vmatmul.f32.gmra.mxu0 %v279
      %v749 = vpop.f32.mrf.mxu0
      %v750 = vadd.f32 %v721, %v749
      %751 = vdwg.mxu0
      %752 = vmatpush.msra.mxu0 %v416
      %753 = vmatpush.msra.mxu0 %v415
      %754 = vmatpush.msra.mxu0 %v414
      %755 = vmatpush.msra.mxu0 %v413
      %756 = vmatpush.msra.mxu0 %v412
      %757 = vmatpush.msra.mxu0 %v411
      %758 = vmatpush.msra.mxu0 %v410
      %759 = vmatpush.msra.mxu0 %v409
      %760 = vmatpush.msra.mxu0 %v408
      %761 = vmatpush.msra.mxu0 %v407
      %762 = vmatpush.msra.mxu0 %v406
      %763 = vmatpush.msra.mxu0 %v405
      %764 = vmatpush.msra.mxu0 %v404
      %765 = vmatpush.msra.mxu0 %v403
      %766 = vmatpush.msra.mxu0 %v402
      %767 = vmatpush.msra.mxu0 %v401
      %768 = vmatmul.f32.gmra.mxu0 %v232
      %v769 = vpop.f32.mrf.mxu0
      %v770 = vadd.f32 %v741, %v769
      %771 = vmatmul.f32.gmra.mxu0 %v248
      %v772 = vpop.f32.mrf.mxu0
      %v773 = vadd.f32 %v744, %v772
      %774 = vmatmul.f32.gmra.mxu0 %v264
      %v775 = vpop.f32.mrf.mxu0
      %v776 = vadd.f32 %v747, %v775
      %777 = vmatmul.f32.gmra.mxu0 %v280
      %v778 = vpop.f32.mrf.mxu0
      %v779 = vadd.f32 %v750, %v778
      %780 = vdwg.mxu0
      %781 = vmatpush.msra.mxu0 %v432
      %782 = vmatpush.msra.mxu0 %v431
      %783 = vmatpush.msra.mxu0 %v430
      %784 = vmatpush.msra.mxu0 %v429
      %785 = vmatpush.msra.mxu0 %v428
      %786 = vmatpush.msra.mxu0 %v427
      %787 = vmatpush.msra.mxu0 %v426
      %788 = vmatpush.msra.mxu0 %v425
      %789 = vmatpush.msra.mxu0 %v424
      %790 = vmatpush.msra.mxu0 %v423
      %791 = vmatpush.msra.mxu0 %v422
      %792 = vmatpush.msra.mxu0 %v421
      %793 = vmatpush.msra.mxu0 %v420
      %794 = vmatpush.msra.mxu0 %v419
      %795 = vmatpush.msra.mxu0 %v418
      %796 = vmatpush.msra.mxu0 %v417
      %797 = vmatmul.f32.gmra.mxu0 %v233
      %v798 = vpop.f32.mrf.mxu0
      %v799 = vadd.f32 %v770, %v798
      %800 = vmatmul.f32.gmra.mxu0 %v249
      %v801 = vpop.f32.mrf.mxu0
      %v802 = vadd.f32 %v773, %v801
      %803 = vmatmul.f32.gmra.mxu0 %v265
      %v804 = vpop.f32.mrf.mxu0
      %v805 = vadd.f32 %v776, %v804
      %806 = vmatmul.f32.gmra.mxu0 %v281
      %v807 = vpop.f32.mrf.mxu0
      %v808 = vadd.f32 %v779, %v807
      %809 = vdwg.mxu0
      %810 = vmatpush.msra.mxu0 %v448
      %811 = vmatpush.msra.mxu0 %v447
      %812 = vmatpush.msra.mxu0 %v446
      %813 = vmatpush.msra.mxu0 %v445
      %814 = vmatpush.msra.mxu0 %v444
      %815 = vmatpush.msra.mxu0 %v443
      %816 = vmatpush.msra.mxu0 %v442
      %817 = vmatpush.msra.mxu0 %v441
      %818 = vmatpush.msra.mxu0 %v440
      %819 = vmatpush.msra.mxu0 %v439
      %820 = vmatpush.msra.mxu0 %v438
      %821 = vmatpush.msra.mxu0 %v437
      %822 = vmatpush.msra.mxu0 %v436
      %823 = vmatpush.msra.mxu0 %v435
      %824 = vmatpush.msra.mxu0 %v434
      %825 = vmatpush.msra.mxu0 %v433
      %826 = vmatmul.f32.gmra.mxu0 %v234
      %v827 = vpop.f32.mrf.mxu0
      %v828 = vadd.f32 %v799, %v827
      %829 = vmatmul.f32.gmra.mxu0 %v250
      %v830 = vpop.f32.mrf.mxu0
      %v831 = vadd.f32 %v802, %v830
      %832 = vmatmul.f32.gmra.mxu0 %v266
      %v833 = vpop.f32.mrf.mxu0
      %v834 = vadd.f32 %v805, %v833
      %835 = vmatmul.f32.gmra.mxu0 %v282
      %v836 = vpop.f32.mrf.mxu0
      %v837 = vadd.f32 %v808, %v836
      %838 = vdwg.mxu0
      %839 = vmatpush.msra.mxu0 %v464
      %840 = vmatpush.msra.mxu0 %v463
      %841 = vmatpush.msra.mxu0 %v462
      %842 = vmatpush.msra.mxu0 %v461
      %843 = vmatpush.msra.mxu0 %v460
      %844 = vmatpush.msra.mxu0 %v459
      %845 = vmatpush.msra.mxu0 %v458
      %846 = vmatpush.msra.mxu0 %v457
      %847 = vmatpush.msra.mxu0 %v456
      %848 = vmatpush.msra.mxu0 %v455
      %849 = vmatpush.msra.mxu0 %v454
      %850 = vmatpush.msra.mxu0 %v453
      %851 = vmatpush.msra.mxu0 %v452
      %852 = vmatpush.msra.mxu0 %v451
      %853 = vmatpush.msra.mxu0 %v450
      %854 = vmatpush.msra.mxu0 %v449
      %855 = vmatmul.f32.gmra.mxu0 %v235
      %v856 = vpop.f32.mrf.mxu0
      %v857 = vadd.f32 %v828, %v856
      %858 = vmatmul.f32.gmra.mxu0 %v251
      %v859 = vpop.f32.mrf.mxu0
      %v860 = vadd.f32 %v831, %v859
      %861 = vmatmul.f32.gmra.mxu0 %v267
      %v862 = vpop.f32.mrf.mxu0
      %v863 = vadd.f32 %v834, %v862
      %864 = vmatmul.f32.gmra.mxu0 %v283
      %v865 = vpop.f32.mrf.mxu0
      %v866 = vadd.f32 %v837, %v865
      %867 = vdwg.mxu0
      %868 = vmatpush.msra.mxu0 %v480
      %869 = vmatpush.msra.mxu0 %v479
      %870 = vmatpush.msra.mxu0 %v478
      %871 = vmatpush.msra.mxu0 %v477
      %872 = vmatpush.msra.mxu0 %v476
      %873 = vmatpush.msra.mxu0 %v475
      %874 = vmatpush.msra.mxu0 %v474
      %875 = vmatpush.msra.mxu0 %v473
      %876 = vmatpush.msra.mxu0 %v472
      %877 = vmatpush.msra.mxu0 %v471
      %878 = vmatpush.msra.mxu0 %v470
      %879 = vmatpush.msra.mxu0 %v469
      %880 = vmatpush.msra.mxu0 %v468
      %881 = vmatpush.msra.mxu0 %v467
      %882 = vmatpush.msra.mxu0 %v466
      %883 = vmatpush.msra.mxu0 %v465
      %884 = vmatmul.f32.gmra.mxu0 %v236
      %v885 = vpop.f32.mrf.mxu0
      %v886 = vadd.f32 %v857, %v885
      %887 = vmatmul.f32.gmra.mxu0 %v252
      %v888 = vpop.f32.mrf.mxu0
      %v889 = vadd.f32 %v860, %v888
      %890 = vmatmul.f32.gmra.mxu0 %v268
      %v891 = vpop.f32.mrf.mxu0
      %v892 = vadd.f32 %v863, %v891
      %893 = vmatmul.f32.gmra.mxu0 %v284
      %v894 = vpop.f32.mrf.mxu0
      %v895 = vadd.f32 %v866, %v894
      %896 = vdwg.mxu0
      %897 = vmatpush.msra.mxu0 %v496
      %898 = vmatpush.msra.mxu0 %v495
      %899 = vmatpush.msra.mxu0 %v494
      %900 = vmatpush.msra.mxu0 %v493
      %901 = vmatpush.msra.mxu0 %v492
      %902 = vmatpush.msra.mxu0 %v491
      %903 = vmatpush.msra.mxu0 %v490
      %904 = vmatpush.msra.mxu0 %v489
      %905 = vmatpush.msra.mxu0 %v488
      %906 = vmatpush.msra.mxu0 %v487
      %907 = vmatpush.msra.mxu0 %v486
      %908 = vmatpush.msra.mxu0 %v485
      %909 = vmatpush.msra.mxu0 %v484
      %910 = vmatpush.msra.mxu0 %v483
      %911 = vmatpush.msra.mxu0 %v482
      %912 = vmatpush.msra.mxu0 %v481
      %913 = vmatmul.f32.gmra.mxu0 %v237
      %v914 = vpop.f32.mrf.mxu0
      %v915 = vadd.f32 %v886, %v914
      %916 = vmatmul.f32.gmra.mxu0 %v253
      %v917 = vpop.f32.mrf.mxu0
      %v918 = vadd.f32 %v889, %v917
      %919 = vmatmul.f32.gmra.mxu0 %v269
      %v920 = vpop.f32.mrf.mxu0
      %v921 = vadd.f32 %v892, %v920
      %922 = vmatmul.f32.gmra.mxu0 %v285
      %v923 = vpop.f32.mrf.mxu0
      %v924 = vadd.f32 %v895, %v923
      %925 = vdwg.mxu0
      %926 = vmatpush.msra.mxu0 %v512
      %927 = vmatpush.msra.mxu0 %v511
      %928 = vmatpush.msra.mxu0 %v510
      %929 = vmatpush.msra.mxu0 %v509
      %930 = vmatpush.msra.mxu0 %v508
      %931 = vmatpush.msra.mxu0 %v507
      %932 = vmatpush.msra.mxu0 %v506
      %933 = vmatpush.msra.mxu0 %v505
      %934 = vmatpush.msra.mxu0 %v504
      %935 = vmatpush.msra.mxu0 %v503
      %936 = vmatpush.msra.mxu0 %v502
      %937 = vmatpush.msra.mxu0 %v501
      %938 = vmatpush.msra.mxu0 %v500
      %939 = vmatpush.msra.mxu0 %v499
      %940 = vmatpush.msra.mxu0 %v498
      %941 = vmatpush.msra.mxu0 %v497
      %942 = vmatmul.f32.gmra.mxu0 %v238
      %v943 = vpop.f32.mrf.mxu0
      %v944 = vadd.f32 %v915, %v943
      %945 = vmatmul.f32.gmra.mxu0 %v254
      %v946 = vpop.f32.mrf.mxu0
      %v947 = vadd.f32 %v918, %v946
      %948 = vmatmul.f32.gmra.mxu0 %v270
      %v949 = vpop.f32.mrf.mxu0
      %v950 = vadd.f32 %v921, %v949
      %951 = vmatmul.f32.gmra.mxu0 %v286
      %v952 = vpop.f32.mrf.mxu0
      %v953 = vadd.f32 %v924, %v952
      %954 = vdwg.mxu0
      %955 = vmatpush.msra.mxu0 %v528
      %956 = vmatpush.msra.mxu0 %v527
      %957 = vmatpush.msra.mxu0 %v526
      %958 = vmatpush.msra.mxu0 %v525
      %959 = vmatpush.msra.mxu0 %v524
      %960 = vmatpush.msra.mxu0 %v523
      %961 = vmatpush.msra.mxu0 %v522
      %962 = vmatpush.msra.mxu0 %v521
      %963 = vmatpush.msra.mxu0 %v520
      %964 = vmatpush.msra.mxu0 %v519
      %965 = vmatpush.msra.mxu0 %v518
      %966 = vmatpush.msra.mxu0 %v517
      %967 = vmatpush.msra.mxu0 %v516
      %968 = vmatpush.msra.mxu0 %v515
      %969 = vmatpush.msra.mxu0 %v514
      %970 = vmatpush.msra.mxu0 %v513
      %971 = vmatmul.f32.gmra.mxu0 %v239
      %v972 = vpop.f32.mrf.mxu0
      %v973 = vadd.f32 %v944, %v972
      %974 = vmatmul.f32.gmra.mxu0 %v255
      %v975 = vpop.f32.mrf.mxu0
      %v976 = vadd.f32 %v947, %v975
      %977 = vmatmul.f32.gmra.mxu0 %v271
      %v978 = vpop.f32.mrf.mxu0
      %v979 = vadd.f32 %v950, %v978
      %980 = vmatmul.f32.gmra.mxu0 %v287
      %v981 = vpop.f32.mrf.mxu0
      %v982 = vadd.f32 %v953, %v981
      %983 = vdwg.mxu0
      %984 = vmatpush.msra.mxu0 %v544
      %985 = vmatpush.msra.mxu0 %v543
      %986 = vmatpush.msra.mxu0 %v542
      %987 = vmatpush.msra.mxu0 %v541
      %988 = vmatpush.msra.mxu0 %v540
      %989 = vmatpush.msra.mxu0 %v539
      %990 = vmatpush.msra.mxu0 %v538
      %991 = vmatpush.msra.mxu0 %v537
      %992 = vmatpush.msra.mxu0 %v536
      %993 = vmatpush.msra.mxu0 %v535
      %994 = vmatpush.msra.mxu0 %v534
      %995 = vmatpush.msra.mxu0 %v533
      %996 = vmatpush.msra.mxu0 %v532
      %997 = vmatpush.msra.mxu0 %v531
      %998 = vmatpush.msra.mxu0 %v530
      %999 = vmatpush.msra.mxu0 %v529
      %1000 = vmatmul.f32.gmra.mxu0 %v240
      %v1001 = vpop.f32.mrf.mxu0
      %v1002 = vadd.f32 %v973, %v1001
      %1003 = vmatmul.f32.gmra.mxu0 %v256
      %v1004 = vpop.f32.mrf.mxu0
      %v1005 = vadd.f32 %v976, %v1004
      %1006 = vmatmul.f32.gmra.mxu0 %v272
      %v1007 = vpop.f32.mrf.mxu0
      %v1008 = vadd.f32 %v979, %v1007
      %1009 = vmatmul.f32.gmra.mxu0 %v288
      %v1010 = vpop.f32.mrf.mxu0
      %v1011 = vadd.f32 %v982, %v1010
      %1012 = vdwg.mxu0
      %v1013 = vxor.u32 %v1002, 2147483648
      %v1014 = vxor.u32 %v1005, 2147483648
      %v1015 = vxor.u32 %v1008, 2147483648
      %v1016 = vxor.u32 %v1011, 2147483648
      %v1017 = vmul.f32 %v1013, 1.442695
      %v1018 = vpow.pop %v1017
      %v1019 = vmul.f32 %v1014, 1.442695
      %v1020 = vpow.pop %v1019
      %v1021 = vmul.f32 %v1015, 1.442695
      %v1022 = vpow.pop %v1021
      %v1023 = vmul.f32 %v1016, 1.442695
      %v1024 = vpow.pop %v1023
      %v1025 = vadd.f32 %v1018, 1.0
      %v1026 = vadd.f32 %v1020, 1.0
      %v1027 = vadd.f32 %v1022, 1.0
      %v1028 = vadd.f32 %v1024, 1.0
      %v1029 = vrcp.pop %v1025
      %v1030 = vmul.f32 %v1025, %v1029
      %v1031 = vsub.f32 1.0, %v1030
      %v1032 = vmul.f32 %v1029, %v1031
      %v1033 = vadd.f32 %v1029, %v1032
      %vm1034 = vweird.f32 %v1025
      %vm1035 = vweird.f32 %v1029
      %vm1036 = vmor %vm1034, %vm1035
      %v1037 = vsel %vm1036, %v1029, %v1033
      %v1038 = vand.u32 2147483647, %v1025
      %vm1039 = vcmp.eq.f32.partialorder %v1038, 8.507059e+37
      %v1040 = vand.u32 %v1025, 2147483648
      %v1041 = vor.u32 1.1754944e-38, %v1040
      %v1042 = vsel %vm1039, %v1041, %v1037
      %v1043 = vmul.f32 1.0, %v1042
      %v1044 = vrcp.pop %v1026
      %v1045 = vmul.f32 %v1026, %v1044
      %v1046 = vsub.f32 1.0, %v1045
      %v1047 = vmul.f32 %v1044, %v1046
      %v1048 = vadd.f32 %v1044, %v1047
      %vm1049 = vweird.f32 %v1026
      %vm1050 = vweird.f32 %v1044
      %vm1051 = vmor %vm1049, %vm1050
      %v1052 = vsel %vm1051, %v1044, %v1048
      %v1053 = vand.u32 2147483647, %v1026
      %vm1054 = vcmp.eq.f32.partialorder %v1053, 8.507059e+37
      %v1055 = vand.u32 %v1026, 2147483648
      %v1056 = vor.u32 1.1754944e-38, %v1055
      %v1057 = vsel %vm1054, %v1056, %v1052
      %v1058 = vmul.f32 1.0, %v1057
      %v1059 = vrcp.pop %v1027
      %v1060 = vmul.f32 %v1027, %v1059
      %v1061 = vsub.f32 1.0, %v1060
      %v1062 = vmul.f32 %v1059, %v1061
      %v1063 = vadd.f32 %v1059, %v1062
      %vm1064 = vweird.f32 %v1027
      %vm1065 = vweird.f32 %v1059
      %vm1066 = vmor %vm1064, %vm1065
      %v1067 = vsel %vm1066, %v1059, %v1063
      %v1068 = vand.u32 2147483647, %v1027
      %vm1069 = vcmp.eq.f32.partialorder %v1068, 8.507059e+37
      %v1070 = vand.u32 %v1027, 2147483648
      %v1071 = vor.u32 1.1754944e-38, %v1070
      %v1072 = vsel %vm1069, %v1071, %v1067
      %v1073 = vmul.f32 1.0, %v1072
      %v1074 = vrcp.pop %v1028
      %v1075 = vmul.f32 %v1028, %v1074
      %v1076 = vsub.f32 1.0, %v1075
      %v1077 = vmul.f32 %v1074, %v1076
      %v1078 = vadd.f32 %v1074, %v1077
      %vm1079 = vweird.f32 %v1028
      %vm1080 = vweird.f32 %v1074
      %vm1081 = vmor %vm1079, %vm1080
      %v1082 = vsel %vm1081, %v1074, %v1078
      %v1083 = vand.u32 2147483647, %v1028
      %vm1084 = vcmp.eq.f32.partialorder %v1083, 8.507059e+37
      %v1085 = vand.u32 %v1028, 2147483648
      %v1086 = vor.u32 1.1754944e-38, %v1085
      %v1087 = vsel %vm1084, %v1086, %v1082
      %v1088 = vmul.f32 1.0, %v1087
      %1089 = vxpose.xlu0.b32.start [1/16] %v1043, 128
      %1090 = vxpose.xlu0.b32.cont [2/16] %v1058, 128
      %1091 = vxpose.xlu0.b32.cont [3/16] %v1073, 128
      %1092 = vxpose.xlu0.b32.cont [4/16] %v1088, 128
      %1093 = vxpose.xlu0.b32.cont [5/16] 0.0, 128
      %1094 = vxpose.xlu0.b32.cont [6/16] 0.0, 128
      %1095 = vxpose.xlu0.b32.cont [7/16] 0.0, 128
      %1096 = vxpose.xlu0.b32.cont [8/16] 0.0, 128
      %1097 = vxpose.xlu0.b32.cont [9/16] 0.0, 128
      %1098 = vxpose.xlu0.b32.cont [10/16] 0.0, 128
      %1099 = vxpose.xlu0.b32.cont [11/16] 0.0, 128
      %1100 = vxpose.xlu0.b32.cont [12/16] 0.0, 128
      %1101 = vxpose.xlu0.b32.cont [13/16] 0.0, 128
      %1102 = vxpose.xlu0.b32.cont [14/16] 0.0, 128
      %1103 = vxpose.xlu0.b32.cont [15/16] 0.0, 128
      %1104 = vxpose.xlu0.b32.end [16/16] 0.0, 128
      %v1105 = vpop.trf.xlu0
      %v1106 = vpop.trf.xlu0
      %v1107 = vpop.trf.xlu0
      %v1108 = vpop.trf.xlu0
      %v1109 = vpop.trf.xlu0
      %v1110 = vpop.trf.xlu0
      %v1111 = vpop.trf.xlu0
      %v1112 = vpop.trf.xlu0
      %v1113 = vpop.trf.xlu0
      %v1114 = vpop.trf.xlu0
      %v1115 = vpop.trf.xlu0
      %v1116 = vpop.trf.xlu0
      %v1117 = vpop.trf.xlu0
      %v1118 = vpop.trf.xlu0
      %v1119 = vpop.trf.xlu0
      %v1120 = vpop.trf.xlu0
      %vm1121 = vcmask 261120
      %v1123 = vsel %vm1121, %v1105, 0
      %1125 = vmatpush.msra.mxu0 0.0
      %1126 = vmatpush.msra.mxu0 0.0
      %1127 = vmatpush.msra.mxu0 0.0
      %1128 = vmatpush.msra.mxu0 0.0
      %1129 = vmatpush.msra.mxu0 0.0
      %1130 = vmatpush.msra.mxu0 0.0
      %1131 = vmatpush.msra.mxu0 0.0
      %1132 = vmatpush.msra.mxu0 0.0
      %1133 = vmatpush.msra.mxu0 0.0
      %1134 = vmatpush.msra.mxu0 0.0
      %1135 = vmatpush.msra.mxu0 0.0
      %1136 = vmatpush.msra.mxu0 0.0
      %1137 = vmatpush.msra.mxu0 %v273
      %1138 = vmatpush.msra.mxu0 %v257
      %1139 = vmatpush.msra.mxu0 %v241
      %1140 = vmatpush.msra.mxu0 %v225
      %1141 = vmatmul.f32.gmra.mxu0 %v1123
      %v1142 = vpop.f32.mrf.mxu0
      %v1143 = vadd.f32 0.0, %v1142
      %1144 = vdwg.mxu0
      %1145 = vmatpush.msra.mxu0 0.0
      %1146 = vmatpush.msra.mxu0 0.0
      %1147 = vmatpush.msra.mxu0 0.0
      %1148 = vmatpush.msra.mxu0 0.0
      %1149 = vmatpush.msra.mxu0 0.0
      %1150 = vmatpush.msra.mxu0 0.0
      %1151 = vmatpush.msra.mxu0 0.0
      %1152 = vmatpush.msra.mxu0 0.0
      %1153 = vmatpush.msra.mxu0 0.0
      %1154 = vmatpush.msra.mxu0 0.0
      %1155 = vmatpush.msra.mxu0 0.0
      %1156 = vmatpush.msra.mxu0 0.0
      %1157 = vmatpush.msra.mxu0 %v274
      %1158 = vmatpush.msra.mxu0 %v258
      %1159 = vmatpush.msra.mxu0 %v242
      %1160 = vmatpush.msra.mxu0 %v226
      %1161 = vmatmul.f32.gmra.mxu0 %v1123
      %v1162 = vpop.f32.mrf.mxu0
      %v1163 = vadd.f32 0.0, %v1162
      %1164 = vdwg.mxu0
      %1165 = vmatpush.msra.mxu0 0.0
      %1166 = vmatpush.msra.mxu0 0.0
      %1167 = vmatpush.msra.mxu0 0.0
      %1168 = vmatpush.msra.mxu0 0.0
      %1169 = vmatpush.msra.mxu0 0.0
      %1170 = vmatpush.msra.mxu0 0.0
      %1171 = vmatpush.msra.mxu0 0.0
      %1172 = vmatpush.msra.mxu0 0.0
      %1173 = vmatpush.msra.mxu0 0.0
      %1174 = vmatpush.msra.mxu0 0.0
      %1175 = vmatpush.msra.mxu0 0.0
      %1176 = vmatpush.msra.mxu0 0.0
      %1177 = vmatpush.msra.mxu0 %v275
      %1178 = vmatpush.msra.mxu0 %v259
      %1179 = vmatpush.msra.mxu0 %v243
      %1180 = vmatpush.msra.mxu0 %v227
      %1181 = vmatmul.f32.gmra.mxu0 %v1123
      %v1182 = vpop.f32.mrf.mxu0
      %v1183 = vadd.f32 0.0, %v1182
      %1184 = vdwg.mxu0
      %1185 = vmatpush.msra.mxu0 0.0
      %1186 = vmatpush.msra.mxu0 0.0
      %1187 = vmatpush.msra.mxu0 0.0
      %1188 = vmatpush.msra.mxu0 0.0
      %1189 = vmatpush.msra.mxu0 0.0
      %1190 = vmatpush.msra.mxu0 0.0
      %1191 = vmatpush.msra.mxu0 0.0
      %1192 = vmatpush.msra.mxu0 0.0
      %1193 = vmatpush.msra.mxu0 0.0
      %1194 = vmatpush.msra.mxu0 0.0
      %1195 = vmatpush.msra.mxu0 0.0
      %1196 = vmatpush.msra.mxu0 0.0
      %1197 = vmatpush.msra.mxu0 %v276
      %1198 = vmatpush.msra.mxu0 %v260
      %1199 = vmatpush.msra.mxu0 %v244
      %1200 = vmatpush.msra.mxu0 %v228
      %1201 = vmatmul.f32.gmra.mxu0 %v1123
      %v1202 = vpop.f32.mrf.mxu0
      %v1203 = vadd.f32 0.0, %v1202
      %1204 = vdwg.mxu0
      %1205 = vmatpush.msra.mxu0 0.0
      %1206 = vmatpush.msra.mxu0 0.0
      %1207 = vmatpush.msra.mxu0 0.0
      %1208 = vmatpush.msra.mxu0 0.0
      %1209 = vmatpush.msra.mxu0 0.0
      %1210 = vmatpush.msra.mxu0 0.0
      %1211 = vmatpush.msra.mxu0 0.0
      %1212 = vmatpush.msra.mxu0 0.0
      %1213 = vmatpush.msra.mxu0 0.0
      %1214 = vmatpush.msra.mxu0 0.0
      %1215 = vmatpush.msra.mxu0 0.0
      %1216 = vmatpush.msra.mxu0 0.0
      %1217 = vmatpush.msra.mxu0 %v277
      %1218 = vmatpush.msra.mxu0 %v261
      %1219 = vmatpush.msra.mxu0 %v245
      %1220 = vmatpush.msra.mxu0 %v229
      %1221 = vmatmul.f32.gmra.mxu0 %v1123
      %v1222 = vpop.f32.mrf.mxu0
      %v1223 = vadd.f32 0.0, %v1222
      %1224 = vdwg.mxu0
      %1225 = vmatpush.msra.mxu0 0.0
      %1226 = vmatpush.msra.mxu0 0.0
      %1227 = vmatpush.msra.mxu0 0.0
      %1228 = vmatpush.msra.mxu0 0.0
      %1229 = vmatpush.msra.mxu0 0.0
      %1230 = vmatpush.msra.mxu0 0.0
      %1231 = vmatpush.msra.mxu0 0.0
      %1232 = vmatpush.msra.mxu0 0.0
      %1233 = vmatpush.msra.mxu0 0.0
      %1234 = vmatpush.msra.mxu0 0.0
      %1235 = vmatpush.msra.mxu0 0.0
      %1236 = vmatpush.msra.mxu0 0.0
      %1237 = vmatpush.msra.mxu0 %v278
      %1238 = vmatpush.msra.mxu0 %v262
      %1239 = vmatpush.msra.mxu0 %v246
      %1240 = vmatpush.msra.mxu0 %v230
      %1241 = vmatmul.f32.gmra.mxu0 %v1123
      %v1242 = vpop.f32.mrf.mxu0
      %v1243 = vadd.f32 0.0, %v1242
      %1244 = vdwg.mxu0
      %1245 = vmatpush.msra.mxu0 0.0
      %1246 = vmatpush.msra.mxu0 0.0
      %1247 = vmatpush.msra.mxu0 0.0
      %1248 = vmatpush.msra.mxu0 0.0
      %1249 = vmatpush.msra.mxu0 0.0
      %1250 = vmatpush.msra.mxu0 0.0
      %1251 = vmatpush.msra.mxu0 0.0
      %1252 = vmatpush.msra.mxu0 0.0
      %1253 = vmatpush.msra.mxu0 0.0
      %1254 = vmatpush.msra.mxu0 0.0
      %1255 = vmatpush.msra.mxu0 0.0
      %1256 = vmatpush.msra.mxu0 0.0
      %1257 = vmatpush.msra.mxu0 %v279
      %1258 = vmatpush.msra.mxu0 %v263
      %1259 = vmatpush.msra.mxu0 %v247
      %1260 = vmatpush.msra.mxu0 %v231
      %1261 = vmatmul.f32.gmra.mxu0 %v1123
      %v1262 = vpop.f32.mrf.mxu0
      %v1263 = vadd.f32 0.0, %v1262
      %1264 = vdwg.mxu0
      %1265 = vmatpush.msra.mxu0 0.0
      %1266 = vmatpush.msra.mxu0 0.0
      %1267 = vmatpush.msra.mxu0 0.0
      %1268 = vmatpush.msra.mxu0 0.0
      %1269 = vmatpush.msra.mxu0 0.0
      %1270 = vmatpush.msra.mxu0 0.0
      %1271 = vmatpush.msra.mxu0 0.0
      %1272 = vmatpush.msra.mxu0 0.0
      %1273 = vmatpush.msra.mxu0 0.0
      %1274 = vmatpush.msra.mxu0 0.0
      %1275 = vmatpush.msra.mxu0 0.0
      %1276 = vmatpush.msra.mxu0 0.0
      %1277 = vmatpush.msra.mxu0 %v280
      %1278 = vmatpush.msra.mxu0 %v264
      %1279 = vmatpush.msra.mxu0 %v248
      %1280 = vmatpush.msra.mxu0 %v232
      %1281 = vmatmul.f32.gmra.mxu0 %v1123
      %v1282 = vpop.f32.mrf.mxu0
      %v1283 = vadd.f32 0.0, %v1282
      %1284 = vdwg.mxu0
      %1285 = vmatpush.msra.mxu0 0.0
      %1286 = vmatpush.msra.mxu0 0.0
      %1287 = vmatpush.msra.mxu0 0.0
      %1288 = vmatpush.msra.mxu0 0.0
      %1289 = vmatpush.msra.mxu0 0.0
      %1290 = vmatpush.msra.mxu0 0.0
      %1291 = vmatpush.msra.mxu0 0.0
      %1292 = vmatpush.msra.mxu0 0.0
      %1293 = vmatpush.msra.mxu0 0.0
      %1294 = vmatpush.msra.mxu0 0.0
      %1295 = vmatpush.msra.mxu0 0.0
      %1296 = vmatpush.msra.mxu0 0.0
      %1297 = vmatpush.msra.mxu0 %v281
      %1298 = vmatpush.msra.mxu0 %v265
      %1299 = vmatpush.msra.mxu0 %v249
      %1300 = vmatpush.msra.mxu0 %v233
      %1301 = vmatmul.f32.gmra.mxu0 %v1123
      %v1302 = vpop.f32.mrf.mxu0
      %v1303 = vadd.f32 0.0, %v1302
      %1304 = vdwg.mxu0
      %1305 = vmatpush.msra.mxu0 0.0
      %1306 = vmatpush.msra.mxu0 0.0
      %1307 = vmatpush.msra.mxu0 0.0
      %1308 = vmatpush.msra.mxu0 0.0
      %1309 = vmatpush.msra.mxu0 0.0
      %1310 = vmatpush.msra.mxu0 0.0
      %1311 = vmatpush.msra.mxu0 0.0
      %1312 = vmatpush.msra.mxu0 0.0
      %1313 = vmatpush.msra.mxu0 0.0
      %1314 = vmatpush.msra.mxu0 0.0
      %1315 = vmatpush.msra.mxu0 0.0
      %1316 = vmatpush.msra.mxu0 0.0
      %1317 = vmatpush.msra.mxu0 %v282
      %1318 = vmatpush.msra.mxu0 %v266
      %1319 = vmatpush.msra.mxu0 %v250
      %1320 = vmatpush.msra.mxu0 %v234
      %1321 = vmatmul.f32.gmra.mxu0 %v1123
      %v1322 = vpop.f32.mrf.mxu0
      %v1323 = vadd.f32 0.0, %v1322
      %1324 = vdwg.mxu0
      %1325 = vmatpush.msra.mxu0 0.0
      %1326 = vmatpush.msra.mxu0 0.0
      %1327 = vmatpush.msra.mxu0 0.0
      %1328 = vmatpush.msra.mxu0 0.0
      %1329 = vmatpush.msra.mxu0 0.0
      %1330 = vmatpush.msra.mxu0 0.0
      %1331 = vmatpush.msra.mxu0 0.0
      %1332 = vmatpush.msra.mxu0 0.0
      %1333 = vmatpush.msra.mxu0 0.0
      %1334 = vmatpush.msra.mxu0 0.0
      %1335 = vmatpush.msra.mxu0 0.0
      %1336 = vmatpush.msra.mxu0 0.0
      %1337 = vmatpush.msra.mxu0 %v283
      %1338 = vmatpush.msra.mxu0 %v267
      %1339 = vmatpush.msra.mxu0 %v251
      %1340 = vmatpush.msra.mxu0 %v235
      %1341 = vmatmul.f32.gmra.mxu0 %v1123
      %v1342 = vpop.f32.mrf.mxu0
      %v1343 = vadd.f32 0.0, %v1342
      %1344 = vdwg.mxu0
      %1345 = vmatpush.msra.mxu0 0.0
      %1346 = vmatpush.msra.mxu0 0.0
      %1347 = vmatpush.msra.mxu0 0.0
      %1348 = vmatpush.msra.mxu0 0.0
      %1349 = vmatpush.msra.mxu0 0.0
      %1350 = vmatpush.msra.mxu0 0.0
      %1351 = vmatpush.msra.mxu0 0.0
      %1352 = vmatpush.msra.mxu0 0.0
      %1353 = vmatpush.msra.mxu0 0.0
      %1354 = vmatpush.msra.mxu0 0.0
      %1355 = vmatpush.msra.mxu0 0.0
      %1356 = vmatpush.msra.mxu0 0.0
      %1357 = vmatpush.msra.mxu0 %v284
      %1358 = vmatpush.msra.mxu0 %v268
      %1359 = vmatpush.msra.mxu0 %v252
      %1360 = vmatpush.msra.mxu0 %v236
      %1361 = vmatmul.f32.gmra.mxu0 %v1123
      %v1362 = vpop.f32.mrf.mxu0
      %v1363 = vadd.f32 0.0, %v1362
      %1364 = vdwg.mxu0
      %1365 = vmatpush.msra.mxu0 0.0
      %1366 = vmatpush.msra.mxu0 0.0
      %1367 = vmatpush.msra.mxu0 0.0
      %1368 = vmatpush.msra.mxu0 0.0
      %1369 = vmatpush.msra.mxu0 0.0
      %1370 = vmatpush.msra.mxu0 0.0
      %1371 = vmatpush.msra.mxu0 0.0
      %1372 = vmatpush.msra.mxu0 0.0
      %1373 = vmatpush.msra.mxu0 0.0
      %1374 = vmatpush.msra.mxu0 0.0
      %1375 = vmatpush.msra.mxu0 0.0
      %1376 = vmatpush.msra.mxu0 0.0
      %1377 = vmatpush.msra.mxu0 %v285
      %1378 = vmatpush.msra.mxu0 %v269
      %1379 = vmatpush.msra.mxu0 %v253
      %1380 = vmatpush.msra.mxu0 %v237
      %1381 = vmatmul.f32.gmra.mxu0 %v1123
      %v1382 = vpop.f32.mrf.mxu0
      %v1383 = vadd.f32 0.0, %v1382
      %1384 = vdwg.mxu0
      %1385 = vmatpush.msra.mxu0 0.0
      %1386 = vmatpush.msra.mxu0 0.0
      %1387 = vmatpush.msra.mxu0 0.0
      %1388 = vmatpush.msra.mxu0 0.0
      %1389 = vmatpush.msra.mxu0 0.0
      %1390 = vmatpush.msra.mxu0 0.0
      %1391 = vmatpush.msra.mxu0 0.0
      %1392 = vmatpush.msra.mxu0 0.0
      %1393 = vmatpush.msra.mxu0 0.0
      %1394 = vmatpush.msra.mxu0 0.0
      %1395 = vmatpush.msra.mxu0 0.0
      %1396 = vmatpush.msra.mxu0 0.0
      %1397 = vmatpush.msra.mxu0 %v286
      %1398 = vmatpush.msra.mxu0 %v270
      %1399 = vmatpush.msra.mxu0 %v254
      %1400 = vmatpush.msra.mxu0 %v238
      %1401 = vmatmul.f32.gmra.mxu0 %v1123
      %v1402 = vpop.f32.mrf.mxu0
      %v1403 = vadd.f32 0.0, %v1402
      %1404 = vdwg.mxu0
      %1405 = vmatpush.msra.mxu0 0.0
      %1406 = vmatpush.msra.mxu0 0.0
      %1407 = vmatpush.msra.mxu0 0.0
      %1408 = vmatpush.msra.mxu0 0.0
      %1409 = vmatpush.msra.mxu0 0.0
      %1410 = vmatpush.msra.mxu0 0.0
      %1411 = vmatpush.msra.mxu0 0.0
      %1412 = vmatpush.msra.mxu0 0.0
      %1413 = vmatpush.msra.mxu0 0.0
      %1414 = vmatpush.msra.mxu0 0.0
      %1415 = vmatpush.msra.mxu0 0.0
      %1416 = vmatpush.msra.mxu0 0.0
      %1417 = vmatpush.msra.mxu0 %v287
      %1418 = vmatpush.msra.mxu0 %v271
      %1419 = vmatpush.msra.mxu0 %v255
      %1420 = vmatpush.msra.mxu0 %v239
      %1421 = vmatmul.f32.gmra.mxu0 %v1123
      %v1422 = vpop.f32.mrf.mxu0
      %v1423 = vadd.f32 0.0, %v1422
      %1424 = vdwg.mxu0
      %1425 = vmatpush.msra.mxu0 0.0
      %1426 = vmatpush.msra.mxu0 0.0
      %1427 = vmatpush.msra.mxu0 0.0
      %1428 = vmatpush.msra.mxu0 0.0
      %1429 = vmatpush.msra.mxu0 0.0
      %1430 = vmatpush.msra.mxu0 0.0
      %1431 = vmatpush.msra.mxu0 0.0
      %1432 = vmatpush.msra.mxu0 0.0
      %1433 = vmatpush.msra.mxu0 0.0
      %1434 = vmatpush.msra.mxu0 0.0
      %1435 = vmatpush.msra.mxu0 0.0
      %1436 = vmatpush.msra.mxu0 0.0
      %1437 = vmatpush.msra.mxu0 %v288
      %1438 = vmatpush.msra.mxu0 %v272
      %1439 = vmatpush.msra.mxu0 %v256
      %1440 = vmatpush.msra.mxu0 %v240
      %1441 = vmatmul.f32.gmra.mxu0 %v1123
      %v1442 = vpop.f32.mrf.mxu0
      %v1443 = vadd.f32 0.0, %v1442
      %1444 = vdwg.mxu0
      %v1445 = vld [vmem:[%s3] sm:$0x7f]
      %v1446 = vld [vmem:[%s3 + $0x8] sm:$0x7f]
      %v1447 = vld [vmem:[%s3 + $0x10] sm:$0x7f]
      %v1448 = vld [vmem:[%s3 + $0x18] sm:$0x7f]
      %v1449 = vld [vmem:[%s3 + $0x20] sm:$0x7f]
      %v1450 = vld [vmem:[%s3 + $0x28] sm:$0x7f]
      %v1451 = vld [vmem:[%s3 + $0x30] sm:$0x7f]
      %v1452 = vld [vmem:[%s3 + $0x38] sm:$0x7f]
      %v1453 = vld [vmem:[%s3 + $0x40] sm:$0x7f]
      %v1454 = vld [vmem:[%s3 + $0x48] sm:$0x7f]
      %v1455 = vld [vmem:[%s3 + $0x50] sm:$0x7f]
      %v1456 = vld [vmem:[%s3 + $0x58] sm:$0x7f]
      %v1457 = vld [vmem:[%s3 + $0x60] sm:$0x7f]
      %v1458 = vld [vmem:[%s3 + $0x68] sm:$0x7f]
      %v1459 = vld [vmem:[%s3 + $0x70] sm:$0x7f]
      %v1460 = vld [vmem:[%s3 + $0x78] sm:$0x7f]
      %v1461 = vmul.f32 %v1143, %v1445
      %v1462 = vmul.f32 %v1163, %v1446
      %v1463 = vmul.f32 %v1183, %v1447
      %v1464 = vmul.f32 %v1203, %v1448
      %v1465 = vmul.f32 %v1223, %v1449
      %v1466 = vmul.f32 %v1243, %v1450
      %v1467 = vmul.f32 %v1263, %v1451
      %v1468 = vmul.f32 %v1283, %v1452
      %v1469 = vmul.f32 %v1303, %v1453
      %v1470 = vmul.f32 %v1323, %v1454
      %v1471 = vmul.f32 %v1343, %v1455
      %v1472 = vmul.f32 %v1363, %v1456
      %v1473 = vmul.f32 %v1383, %v1457
      %v1474 = vmul.f32 %v1403, %v1458
      %v1475 = vmul.f32 %v1423, %v1459
      %v1476 = vmul.f32 %v1443, %v1460
      %v1477 = vld [vmem:[%s4] sm:$0x7f]
      %v1478 = vld [vmem:[%s4 + $0x8] sm:$0x7f]
      %v1479 = vld [vmem:[%s4 + $0x10] sm:$0x7f]
      %v1480 = vld [vmem:[%s4 + $0x18] sm:$0x7f]
      %v1481 = vld [vmem:[%s4 + $0x20] sm:$0x7f]
      %v1482 = vld [vmem:[%s4 + $0x28] sm:$0x7f]
      %v1483 = vld [vmem:[%s4 + $0x30] sm:$0x7f]
      %v1484 = vld [vmem:[%s4 + $0x38] sm:$0x7f]
      %v1485 = vld [vmem:[%s4 + $0x40] sm:$0x7f]
      %v1486 = vld [vmem:[%s4 + $0x48] sm:$0x7f]
      %v1487 = vld [vmem:[%s4 + $0x50] sm:$0x7f]
      %v1488 = vld [vmem:[%s4 + $0x58] sm:$0x7f]
      %v1489 = vld [vmem:[%s4 + $0x60] sm:$0x7f]
      %v1490 = vld [vmem:[%s4 + $0x68] sm:$0x7f]
      %v1491 = vld [vmem:[%s4 + $0x70] sm:$0x7f]
      %v1492 = vld [vmem:[%s4 + $0x78] sm:$0x7f]
      %v1493 = vadd.f32 %v1461, %v1477
      %v1494 = vadd.f32 %v1462, %v1478
      %v1495 = vadd.f32 %v1463, %v1479
      %v1496 = vadd.f32 %v1464, %v1480
      %v1497 = vadd.f32 %v1465, %v1481
      %v1498 = vadd.f32 %v1466, %v1482
      %v1499 = vadd.f32 %v1467, %v1483
      %v1500 = vadd.f32 %v1468, %v1484
      %v1501 = vadd.f32 %v1469, %v1485
      %v1502 = vadd.f32 %v1470, %v1486
      %v1503 = vadd.f32 %v1471, %v1487
      %v1504 = vadd.f32 %v1472, %v1488
      %v1505 = vadd.f32 %v1473, %v1489
      %v1506 = vadd.f32 %v1474, %v1490
      %v1507 = vadd.f32 %v1475, %v1491
      %v1508 = vadd.f32 %v1476, %v1492
      %1509 = vst [vmem:[%s224] sm:$0x7f] %v1493
      %1510 = vst [vmem:[%s224 + $0x8] sm:$0x7f] %v1494
      %1511 = vst [vmem:[%s224 + $0x10] sm:$0x7f] %v1495
      %1512 = vst [vmem:[%s224 + $0x18] sm:$0x7f] %v1496
      %1513 = vst [vmem:[%s224 + $0x20] sm:$0x7f] %v1497
      %1514 = vst [vmem:[%s224 + $0x28] sm:$0x7f] %v1498
      %1515 = vst [vmem:[%s224 + $0x30] sm:$0x7f] %v1499
      %1516 = vst [vmem:[%s224 + $0x38] sm:$0x7f] %v1500
      %1517 = vst [vmem:[%s224 + $0x40] sm:$0x7f] %v1501
      %1518 = vst [vmem:[%s224 + $0x48] sm:$0x7f] %v1502
      %1519 = vst [vmem:[%s224 + $0x50] sm:$0x7f] %v1503
      %1520 = vst [vmem:[%s224 + $0x58] sm:$0x7f] %v1504
      %1521 = vst [vmem:[%s224 + $0x60] sm:$0x7f] %v1505
      %1522 = vst [vmem:[%s224 + $0x68] sm:$0x7f] %v1506
      %1523 = vst [vmem:[%s224 + $0x70] sm:$0x7f] %v1507
      %1524 = vst [vmem:[%s224 + $0x78] sm:$0x7f] %v1508
      %p1525 = scmp.lt.s32.totalorder %s16, 1
      %s1526 = scalar_select %p1525, %s16, 1
      %s1527 = smul.addr %s1526, 16
      %s1528 = smul.addr %s1527, 8
      %s1529 = scalar_lea.vmem %s5, %s1528
      // Predicated region
      $region41: #{baseline_forward.1} parent=39 // pred_check
        %p1530 = pneg %p144
      $region42: #{baseline_forward.1} parent=39 // pred_check_branch
        %1532 = sbr.rel (%p1530) target = $region44
      $region43: #{baseline_forward.1} parent=39 // pred_region
        _
      $region44: #{baseline_forward.1} parent=39 // pred_fallthru
        _
    $region40: #{baseline_forward.1} parent=5 // pred_fallthru
      _
    %p1533 = scmp.le.s32.totalorder 2, %s11
    // Predicated region
    $region45: #{baseline_forward.1} parent=5 // pred_check
      %p1534 = pneg %p1533
    $region46: #{baseline_forward.1} parent=5 // pred_check_branch
      %1536 = sbr.rel (%p1534) target = $region48
    $region47: #{baseline_forward.1} parent=5 // pred_region
      %s1537 = ssub.s32 %s11, 2
      // Predicated region
      $region49: #{baseline_forward.1} parent=47 // pred_check
        %p1538 = pneg %p150
      $region50: #{baseline_forward.1} parent=47 // pred_check_branch
        %1540 = sbr.rel (%p1538) target = $region52
      $region51: #{baseline_forward.1} parent=47 // pred_region
        %p1541 = scmp.lt.s32.totalorder %s17, 1
        %s1542 = scalar_select %p1541, %s17, 1
        %s1543 = smul.addr %s1542, 16
        %s1544 = smul.addr %s1543, 8
        %s1545 = scalar_lea.vmem %s5, %s1544
      $region52: #{baseline_forward.1} parent=47 // pred_fallthru
        _
    $region48: #{baseline_forward.1} parent=5 // pred_fallthru
      _
  $region6: #{baseline_forward.1} parent=0 // loop_footer
    %s15 = sadd.s32 1, %s11
  $region7: #{baseline_forward.1} parent=0 // loop_footer_branch
    %10 = sbr.rel target = $region3
  $region8: #{baseline_forward.1} parent=0 // loop_exit
    _

</llo_original>
